<compile_context>
chip_gen: v5e
topology: v5e:2x2
jax: 0.10.0
libtpu: 0.0.40
codegen_flags: <defaults>
</compile_context>

<pallas_src>
import numpy as np
import jax
import jax.numpy as jnp
from jax import lax
from jax.experimental import pallas as pl
from jax.experimental.pallas import tpu as pltpu

VGG_CFG = {
    'VGG11': [64, 'M', 128, 'M', 256, 256, 'M', 512, 512, 'M', 512, 512, 'M'],
    'VGG13': [64, 64, 'M', 128, 128, 'M', 256, 256, 'M', 512, 512, 'M', 512, 512, 'M'],
    'VGG16': [64, 64, 'M', 128, 128, 'M', 256, 256, 256, 'M', 512, 512, 512, 'M',
              512, 512, 512, 'M'],
    'VGG19': [64, 64, 'M', 128, 128, 'M', 256, 256, 256, 256, 'M', 512, 512, 512, 512,
              'M', 512, 512, 512, 512, 'M'],
}

BN_EPS = 1e-5


# ----------------------------------------------------------------------------
# Fused conv3x3 + (bias/BN affine) + ReLU + optional 2x2 maxpool kernel
# ----------------------------------------------------------------------------
def _make_conv_block_kernel(H, W, Cin, Cout, do_relu, do_pool):
    HW = H * W
    Ho, Wo = H // 2, W // 2

    def kernel(xp_ref, w_ref, scale_ref, shift_ref, o_ref, *scratch):
        # 3x3 conv as 9 shifted matmuls over the padded VMEM tile (no HBM im2col).
        acc = jnp.zeros((HW, Cout), jnp.float32)
        for t in range(9):
            kh, kw = t // 3, t % 3
            patch = xp_ref[0, kh:kh + H, kw:kw + W, :].reshape(HW, Cin)
            acc = acc + jnp.dot(patch, w_ref[t],
                                preferred_element_type=jnp.float32)

        # Fused epilogue: folded bias+BN affine, then ReLU.
        y = acc * scale_ref[...] + shift_ref[...]          # (HW, Cout) * (1, Cout)
        if do_relu:
            y = jnp.maximum(y, 0.0)

        if do_pool:
            s2 = scratch[0]                                # VMEM (Ho, W, Cout)
            # h-pair max: layout-trivial reshape + aligned sublane-slices.
            y3 = y.reshape(Ho, 2 * W, Cout)
            s2[...] = jnp.maximum(y3[:, :W, :], y3[:, W:, :])
            # w-pair max: stride-2 sublane reads from the VMEM scratch.
            c = s2[:, pl.ds(0, Wo, 2), :]
            d = s2[:, pl.ds(1, Wo, 2), :]
            o_ref[...] = jnp.maximum(c, d).reshape(1, Ho, Wo, Cout)
        else:
            o_ref[...] = y.reshape(1, H, W, Cout)

    return kernel


def conv_block_pallas(x_nhwc, blk):
    B, H, W, Cin = x_nhwc.shape
    W9 = blk['W9']                                         # (9, Cin, Cout)
    Cout = W9.shape[-1]
    do_pool = blk['pool']
    Ho, Wo = (H // 2, W // 2) if do_pool else (H, W)

    xp = jnp.pad(x_nhwc, ((0, 0), (1, 1), (1, 1), (0, 0)))  # halo pad=1 (small XLA op)
    scratch = [pltpu.VMEM((H // 2, W, Cout), jnp.float32)] if do_pool else []

    out = pl.pallas_call(
        _make_conv_block_kernel(H, W, Cin, Cout, blk['relu'], do_pool),
        out_shape=jax.ShapeDtypeStruct((B, Ho, Wo, Cout), jnp.float32),
        grid=(B,),
        in_specs=[
            pl.BlockSpec((1, H + 2, W + 2, Cin), lambda b: (b, 0, 0, 0)),
            pl.BlockSpec((9, Cin, Cout), lambda b: (0, 0, 0)),
            pl.BlockSpec((1, Cout), lambda b: (0, 0)),
            pl.BlockSpec((1, Cout), lambda b: (0, 0)),
        ],
        out_specs=pl.BlockSpec((1, Ho, Wo, Cout), lambda b: (b, 0, 0, 0)),
        scratch_shapes=scratch,
        compiler_params=pltpu.CompilerParams(
            dimension_semantics=("parallel",),
            vmem_limit_bytes=32 * 1024 * 1024),
    )(xp, W9, blk['scale'], blk['shift'])
    return out


# ----------------------------------------------------------------------------
# Neighbor kernel-density ratio: per-neighbor accumulation (no (B,Nn,F) broadcast)
# ----------------------------------------------------------------------------
def _make_nbr_kernel(Nn, inv_s):
    def kernel(x_ref, nbr_ref, mask_ref, o_ref):
        x = x_ref[...]                                     # (B, F)
        nr = jnp.zeros((x.shape[0], 1), jnp.float32)
        dr = jnp.zeros((x.shape[0], 1), jnp.float32)
        for j in range(Nn):                                # Nn small & static -> unrolled
            nb = nbr_ref[j:j + 1, :]                       # (1, F)
            d = jnp.sum(jnp.abs(x - nb), axis=-1, keepdims=True)   # (B, 1), XLU reduce
            e = jnp.exp(-d * inv_s)                        # EUP
            dr = dr + e
            nr = nr + e * mask_ref[:, j:j + 1]             # (B,1) * (1,1)
        o_ref[...] = nr * pl.reciprocal(dr, approx=True)   # divide on the EUP
    return kernel


def nbr_ratio_pallas(x_feat_1d, nbr_feats, mask_row, s):
    B, F = x_feat_1d.shape
    Nn = nbr_feats.shape[0]
    out = pl.pallas_call(
        _make_nbr_kernel(Nn, 1.0 / float(s)),
        out_shape=jax.ShapeDtypeStruct((B, 1), jnp.float32),
        grid=(1,),
        in_specs=[pl.BlockSpec((B, F), lambda i: (0, 0)),
                  pl.BlockSpec((Nn, F), lambda i: (0, 0)),
                  pl.BlockSpec((1, Nn), lambda i: (0, 0))],
        out_specs=pl.BlockSpec((B, 1), lambda i: (0, 0)),
    )(x_feat_1d, nbr_feats, mask_row)
    return out[:, 0]


# ----------------------------------------------------------------------------
# Deterministic parameter construction (mirrors _make_layers structure)
# ----------------------------------------------------------------------------
def make_layers_params(vgg_name, num_channels, layer_id, key):
    specs = []
    in_c = num_channels
    for v in VGG_CFG[vgg_name]:
        if len(specs) > layer_id:
            break
        if v == 'M':
            specs.append(('maxpool', None))
        else:
            key, k1, k2, k3, k4, k5, k6 = jax.random.split(key, 7)
            W = jax.random.normal(k1, (v, in_c, 3, 3), jnp.float32) / np.sqrt(in_c * 9)
            b = 0.01 * jax.random.normal(k2, (v,), jnp.float32)
            gamma = 1.0 + 0.1 * jax.random.normal(k3, (v,), jnp.float32)
            beta = 0.1 * jax.random.normal(k4, (v,), jnp.float32)
            mean = 0.1 * jax.random.normal(k5, (v,), jnp.float32)
            var = 1.0 + 0.1 * jnp.abs(jax.random.normal(k6, (v,), jnp.float32))
            specs.append(('conv', {'W': W, 'b': b}))
            specs.append(('bn', {'gamma': gamma, 'beta': beta, 'mean': mean, 'var': var}))
            specs.append(('relu', None))
            in_c = v
    specs.append(('avgpool1', None))   # AvgPool2d(kernel=1, stride=1) == identity
    return specs


def build_fused_blocks(layers, layer_id):
    """Greedily fuse conv(+bn)(+relu)(+maxpool) within the prefix; hoist all param prep."""
    active = layers[:layer_id + 1]
    blocks = []
    i = 0
    while i < len(active):
        kind, p = active[i]
        if kind == 'conv':
            W, b = p['W'], p['b']
            Cout, Cin = W.shape[0], W.shape[1]
            scale = jnp.ones((Cout,), jnp.float32)
            shift = b
            relu = False
            pool = False
            j = i + 1
            if j < len(active) and active[j][0] == 'bn':
                bn = active[j][1]
                s_ = bn['gamma'] / jnp.sqrt(bn['var'] + BN_EPS)
                scale = s_
                shift = (b - bn['mean']) * s_ + bn['beta']   # conv bias folded into BN shift
                j += 1
            if j < len(active) and active[j][0] == 'relu':
                relu = True
                j += 1
            if j < len(active) and active[j][0] == 'maxpool':
                pool = True
                j += 1
            W9 = jnp.transpose(W, (2, 3, 1, 0)).reshape(9, Cin, Cout)   # (kh*3+kw, Cin, Cout)
            blocks.append({'W9': W9,
                           'scale': scale.reshape(1, Cout),
                           'shift': shift.reshape(1, Cout),
                           'relu': relu, 'pool': pool})
            i = j
        elif kind == 'avgpool1':
            i += 1                                   # identity
        elif kind == 'maxpool':
            # Unreachable for VGG cfgs (an 'M' is always preceded by conv/bn/relu).
            raise NotImplementedError("standalone maxpool block")
        else:
            i += 1
    return blocks


def _mode_smallest(labels_np):
    # torch.Tensor.mode(): most frequent value (smallest on tie here)
    counts = np.bincount(labels_np.astype(np.int64))
    return int(np.argmax(counts))


# ----------------------------------------------------------------------------
# Full forward, matching customVGG.forward semantics
# ----------------------------------------------------------------------------
def custom_vgg_forward(x_nchw, blocks, nbr_feats, mask_row, s):
    x = jnp.transpose(x_nchw, (0, 2, 3, 1))        # NCHW -> NHWC for the kernels
    for blk in blocks:
        x = conv_block_pallas(x, blk)
    x_feat = jnp.transpose(x, (0, 3, 1, 2))        # back to NCHW (matches torch x_feat)
    x_feat_1d = x_feat.reshape(x_feat.shape[0], -1)
    out = nbr_ratio_pallas(x_feat_1d, nbr_feats, mask_row, s)
    return out, x_feat


# ----------------------------------------------------------------------------
# Pure-JAX reference (unfused; sanity check for the fused kernels)
# ----------------------------------------------------------------------------
def reference_forward(x_nchw, layers, layer_id, nbr_feats, mask_row, s):
    x = x_nchw
    for kind, p in layers[:layer_id + 1]:
        if kind == 'conv':
            x = lax.conv_general_dilated(
                x, p['W'], (1, 1), ((1, 1), (1, 1)),
                dimension_numbers=('NCHW', 'OIHW', 'NCHW'),
                precision=lax.Precision.HIGHEST)
            x = x + p['b'][None, :, None, None]
        elif kind == 'bn':
            scale = p['gamma'] / jnp.sqrt(p['var'] + BN_EPS)
            shift = p['beta'] - p['mean'] * scale
            x = x * scale[None, :, None, None] + shift[None, :, None, None]
        elif kind == 'relu':
            x = jnp.maximum(x, 0.0)
        elif kind == 'maxpool':
            B, C, H, W = x.shape
            x = x.reshape(B, C, H // 2, 2, W // 2, 2).max(axis=(3, 5))
        elif kind == 'avgpool1':
            pass
    x_feat = x
    xf = x_feat.reshape(x_feat.shape[0], -1)
    d = jnp.sum(jnp.abs(xf[:, None, :] - nbr_feats[None, :, :]), axis=-1)
    e = jnp.exp(-d / s)
    nr = (e * mask_row).sum(-1)
    dr = e.sum(-1)
    return nr / dr, x_feat


# ----------------------------------------------------------------------------
if __name__ == "__main__":
    key = jax.random.PRNGKey(0)
    key, kx, kn, kl, kp = jax.random.split(key, 5)

    B, C, H, W = 2, 3, 16, 16
    layer_id = 7           # VGG11 prefix: conv64+bn+relu, maxpool, conv128+bn+relu, maxpool
    s = 500.0

    x = jax.random.normal(kx, (B, C, H, W), jnp.float32)
    layers = make_layers_params('VGG11', C, layer_id, kp)
    blocks = build_fused_blocks(layers, layer_id)

    F = 128 * (H // 4) * (W // 4)      # feature dim after the prefix: (128, 4, 4) -> 2048
    Nn = 8
    nbr_feats = 0.5 * jnp.abs(jax.random.normal(kn, (Nn, F), jnp.float32))
    nbr_labels = jax.random.randint(kl, (Nn,), 0, 10)

    # Host-side mode/mask computation hoisted out of the forward path (done once).
    labels_np = np.asarray(nbr_labels)
    pred_cls = _mode_smallest(labels_np)
    mask_row = jnp.asarray((labels_np == pred_cls).astype(np.float32)).reshape(1, Nn)

    out, x_feat = custom_vgg_forward(x, blocks, nbr_feats, mask_row, s)
    out = jax.block_until_ready(out)
    x_feat = jax.block_until_ready(x_feat)

    ref_out, ref_feat = reference_forward(x, layers, layer_id, nbr_feats, mask_row, s)
    np.testing.assert_allclose(np.asarray(x_feat), np.asarray(ref_feat),
                               rtol=1e-2, atol=1e-2)
    np.testing.assert_allclose(np.asarray(out), np.asarray(ref_out),
                               rtol=1e-2, atol=1e-2)

    print("KERNEL_OK")
</pallas_src>

<mosaic_0001>
module attributes {stable_mosaic.version = 11 : i64} {
  func.func @kernel(%arg0: i32, %arg1: memref<1x18x18x3xf32, #tpu.memory_space<vmem>>, %arg2: memref<9x3x64xf32, #tpu.memory_space<vmem>>, %arg3: memref<1x64xf32, #tpu.memory_space<vmem>>, %arg4: memref<1x64xf32, #tpu.memory_space<vmem>>, %arg5: memref<1x8x8x64xf32, #tpu.memory_space<vmem>>, %arg6: memref<8x16x64xf32, #tpu.memory_space<vmem>>) attributes {dimension_semantics = [#tpu.dimension_semantics<parallel>], iteration_bounds = array<i64: 2>, scalar_prefetch = 0 : i64, scratch_operands = 1 : i64, tpu.core_type = #tpu.core_type<tc>, window_params = [{transform_indices = @transform_0, window_bounds = array<i64: 1, 18, 18, 3>}, {pipeline_mode = #tpu.pipeline_mode<synchronous>, transform_indices = @transform_1, window_bounds = array<i64: 9, 3, 64>}, {pipeline_mode = #tpu.pipeline_mode<synchronous>, transform_indices = @transform_2, window_bounds = array<i64: 1, 64>}, {pipeline_mode = #tpu.pipeline_mode<synchronous>, transform_indices = @transform_3, window_bounds = array<i64: 1, 64>}, {transform_indices = @transform_4, window_bounds = array<i64: 1, 8, 8, 64>}]} {
    %cst = arith.constant 0.000000e+00 : f32
    %0 = vector.broadcast %cst : f32 to vector<256x64xf32>
    %c0 = arith.constant 0 : index
    %c0_0 = arith.constant 0 : index
    %c0_1 = arith.constant 0 : index
    %c0_2 = arith.constant 0 : index
    %1 = vector.load %arg1[%c0, %c0_0, %c0_1, %c0_2] : memref<1x18x18x3xf32, #tpu.memory_space<vmem>>, vector<1x16x16x3xf32>
    %2 = vector.shape_cast %1 : vector<1x16x16x3xf32> to vector<16x16x3xf32>
    %3 = vector.shape_cast %2 : vector<16x16x3xf32> to vector<256x3xf32>
    %c0_3 = arith.constant 0 : index
    %c0_4 = arith.constant 0 : index
    %c0_5 = arith.constant 0 : index
    %4 = vector.load %arg2[%c0_3, %c0_4, %c0_5] : memref<9x3x64xf32, #tpu.memory_space<vmem>>, vector<1x3x64xf32>
    %5 = vector.shape_cast %4 : vector<1x3x64xf32> to vector<3x64xf32>
    %cst_6 = arith.constant dense<0.000000e+00> : vector<256x64xf32>
    %6 = tpu.matmul %3, %5, %cst_6 {dimension_numbers = #tpu.dot_dimension_numbers<[1], [0], [0], [1], [0, 0, 1, 1], [], []>} : vector<256x3xf32>, vector<3x64xf32>, vector<256x64xf32> -> vector<256x64xf32>
    %7 = arith.addf %0, %6 : vector<256x64xf32>
    %c0_7 = arith.constant 0 : index
    %c0_8 = arith.constant 0 : index
    %c1 = arith.constant 1 : index
    %c0_9 = arith.constant 0 : index
    %8 = vector.load %arg1[%c0_7, %c0_8, %c1, %c0_9] : memref<1x18x18x3xf32, #tpu.memory_space<vmem>>, vector<1x16x16x3xf32>
    %9 = vector.shape_cast %8 : vector<1x16x16x3xf32> to vector<16x16x3xf32>
    %10 = vector.shape_cast %9 : vector<16x16x3xf32> to vector<256x3xf32>
    %c1_10 = arith.constant 1 : index
    %c0_11 = arith.constant 0 : index
    %c0_12 = arith.constant 0 : index
    %11 = vector.load %arg2[%c1_10, %c0_11, %c0_12] : memref<9x3x64xf32, #tpu.memory_space<vmem>>, vector<1x3x64xf32>
    %12 = vector.shape_cast %11 : vector<1x3x64xf32> to vector<3x64xf32>
    %cst_13 = arith.constant dense<0.000000e+00> : vector<256x64xf32>
    %13 = tpu.matmul %10, %12, %cst_13 {dimension_numbers = #tpu.dot_dimension_numbers<[1], [0], [0], [1], [0, 0, 1, 1], [], []>} : vector<256x3xf32>, vector<3x64xf32>, vector<256x64xf32> -> vector<256x64xf32>
    %14 = arith.addf %7, %13 : vector<256x64xf32>
    %c0_14 = arith.constant 0 : index
    %c0_15 = arith.constant 0 : index
    %c2 = arith.constant 2 : index
    %c0_16 = arith.constant 0 : index
    %15 = vector.load %arg1[%c0_14, %c0_15, %c2, %c0_16] : memref<1x18x18x3xf32, #tpu.memory_space<vmem>>, vector<1x16x16x3xf32>
    %16 = vector.shape_cast %15 : vector<1x16x16x3xf32> to vector<16x16x3xf32>
    %17 = vector.shape_cast %16 : vector<16x16x3xf32> to vector<256x3xf32>
    %c2_17 = arith.constant 2 : index
    %c0_18 = arith.constant 0 : index
    %c0_19 = arith.constant 0 : index
    %18 = vector.load %arg2[%c2_17, %c0_18, %c0_19] : memref<9x3x64xf32, #tpu.memory_space<vmem>>, vector<1x3x64xf32>
    %19 = vector.shape_cast %18 : vector<1x3x64xf32> to vector<3x64xf32>
    %cst_20 = arith.constant dense<0.000000e+00> : vector<256x64xf32>
    %20 = tpu.matmul %17, %19, %cst_20 {dimension_numbers = #tpu.dot_dimension_numbers<[1], [0], [0], [1], [0, 0, 1, 1], [], []>} : vector<256x3xf32>, vector<3x64xf32>, vector<256x64xf32> -> vector<256x64xf32>
    %21 = arith.addf %14, %20 : vector<256x64xf32>
    %c0_21 = arith.constant 0 : index
    %c1_22 = arith.constant 1 : index
    %c0_23 = arith.constant 0 : index
    %c0_24 = arith.constant 0 : index
    %22 = vector.load %arg1[%c0_21, %c1_22, %c0_23, %c0_24] : memref<1x18x18x3xf32, #tpu.memory_space<vmem>>, vector<1x16x16x3xf32>
    %23 = vector.shape_cast %22 : vector<1x16x16x3xf32> to vector<16x16x3xf32>
    %24 = vector.shape_cast %23 : vector<16x16x3xf32> to vector<256x3xf32>
    %c3 = arith.constant 3 : index
    %c0_25 = arith.constant 0 : index
    %c0_26 = arith.constant 0 : index
    %25 = vector.load %arg2[%c3, %c0_25, %c0_26] : memref<9x3x64xf32, #tpu.memory_space<vmem>>, vector<1x3x64xf32>
    %26 = vector.shape_cast %25 : vector<1x3x64xf32> to vector<3x64xf32>
    %cst_27 = arith.constant dense<0.000000e+00> : vector<256x64xf32>
    %27 = tpu.matmul %24, %26, %cst_27 {dimension_numbers = #tpu.dot_dimension_numbers<[1], [0], [0], [1], [0, 0, 1, 1], [], []>} : vector<256x3xf32>, vector<3x64xf32>, vector<256x64xf32> -> vector<256x64xf32>
    %28 = arith.addf %21, %27 : vector<256x64xf32>
    %c0_28 = arith.constant 0 : index
    %c1_29 = arith.constant 1 : index
    %c1_30 = arith.constant 1 : index
    %c0_31 = arith.constant 0 : index
    %29 = vector.load %arg1[%c0_28, %c1_29, %c1_30, %c0_31] : memref<1x18x18x3xf32, #tpu.memory_space<vmem>>, vector<1x16x16x3xf32>
    %30 = vector.shape_cast %29 : vector<1x16x16x3xf32> to vector<16x16x3xf32>
    %31 = vector.shape_cast %30 : vector<16x16x3xf32> to vector<256x3xf32>
    %c4 = arith.constant 4 : index
    %c0_32 = arith.constant 0 : index
    %c0_33 = arith.constant 0 : index
    %32 = vector.load %arg2[%c4, %c0_32, %c0_33] : memref<9x3x64xf32, #tpu.memory_space<vmem>>, vector<1x3x64xf32>
    %33 = vector.shape_cast %32 : vector<1x3x64xf32> to vector<3x64xf32>
    %cst_34 = arith.constant dense<0.000000e+00> : vector<256x64xf32>
    %34 = tpu.matmul %31, %33, %cst_34 {dimension_numbers = #tpu.dot_dimension_numbers<[1], [0], [0], [1], [0, 0, 1, 1], [], []>} : vector<256x3xf32>, vector<3x64xf32>, vector<256x64xf32> -> vector<256x64xf32>
    %35 = arith.addf %28, %34 : vector<256x64xf32>
    %c0_35 = arith.constant 0 : index
    %c1_36 = arith.constant 1 : index
    %c2_37 = arith.constant 2 : index
    %c0_38 = arith.constant 0 : index
    %36 = vector.load %arg1[%c0_35, %c1_36, %c2_37, %c0_38] : memref<1x18x18x3xf32, #tpu.memory_space<vmem>>, vector<1x16x16x3xf32>
    %37 = vector.shape_cast %36 : vector<1x16x16x3xf32> to vector<16x16x3xf32>
    %38 = vector.shape_cast %37 : vector<16x16x3xf32> to vector<256x3xf32>
    %c5 = arith.constant 5 : index
    %c0_39 = arith.constant 0 : index
    %c0_40 = arith.constant 0 : index
    %39 = vector.load %arg2[%c5, %c0_39, %c0_40] : memref<9x3x64xf32, #tpu.memory_space<vmem>>, vector<1x3x64xf32>
    %40 = vector.shape_cast %39 : vector<1x3x64xf32> to vector<3x64xf32>
    %cst_41 = arith.constant dense<0.000000e+00> : vector<256x64xf32>
    %41 = tpu.matmul %38, %40, %cst_41 {dimension_numbers = #tpu.dot_dimension_numbers<[1], [0], [0], [1], [0, 0, 1, 1], [], []>} : vector<256x3xf32>, vector<3x64xf32>, vector<256x64xf32> -> vector<256x64xf32>
    %42 = arith.addf %35, %41 : vector<256x64xf32>
    %c0_42 = arith.constant 0 : index
    %c2_43 = arith.constant 2 : index
    %c0_44 = arith.constant 0 : index
    %c0_45 = arith.constant 0 : index
    %43 = vector.load %arg1[%c0_42, %c2_43, %c0_44, %c0_45] : memref<1x18x18x3xf32, #tpu.memory_space<vmem>>, vector<1x16x16x3xf32>
    %44 = vector.shape_cast %43 : vector<1x16x16x3xf32> to vector<16x16x3xf32>
    %45 = vector.shape_cast %44 : vector<16x16x3xf32> to vector<256x3xf32>
    %c6 = arith.constant 6 : index
    %c0_46 = arith.constant 0 : index
    %c0_47 = arith.constant 0 : index
    %46 = vector.load %arg2[%c6, %c0_46, %c0_47] : memref<9x3x64xf32, #tpu.memory_space<vmem>>, vector<1x3x64xf32>
    %47 = vector.shape_cast %46 : vector<1x3x64xf32> to vector<3x64xf32>
    %cst_48 = arith.constant dense<0.000000e+00> : vector<256x64xf32>
    %48 = tpu.matmul %45, %47, %cst_48 {dimension_numbers = #tpu.dot_dimension_numbers<[1], [0], [0], [1], [0, 0, 1, 1], [], []>} : vector<256x3xf32>, vector<3x64xf32>, vector<256x64xf32> -> vector<256x64xf32>
    %49 = arith.addf %42, %48 : vector<256x64xf32>
    %c0_49 = arith.constant 0 : index
    %c2_50 = arith.constant 2 : index
    %c1_51 = arith.constant 1 : index
    %c0_52 = arith.constant 0 : index
    %50 = vector.load %arg1[%c0_49, %c2_50, %c1_51, %c0_52] : memref<1x18x18x3xf32, #tpu.memory_space<vmem>>, vector<1x16x16x3xf32>
    %51 = vector.shape_cast %50 : vector<1x16x16x3xf32> to vector<16x16x3xf32>
    %52 = vector.shape_cast %51 : vector<16x16x3xf32> to vector<256x3xf32>
    %c7 = arith.constant 7 : index
    %c0_53 = arith.constant 0 : index
    %c0_54 = arith.constant 0 : index
    %53 = vector.load %arg2[%c7, %c0_53, %c0_54] : memref<9x3x64xf32, #tpu.memory_space<vmem>>, vector<1x3x64xf32>
    %54 = vector.shape_cast %53 : vector<1x3x64xf32> to vector<3x64xf32>
    %cst_55 = arith.constant dense<0.000000e+00> : vector<256x64xf32>
    %55 = tpu.matmul %52, %54, %cst_55 {dimension_numbers = #tpu.dot_dimension_numbers<[1], [0], [0], [1], [0, 0, 1, 1], [], []>} : vector<256x3xf32>, vector<3x64xf32>, vector<256x64xf32> -> vector<256x64xf32>
    %56 = arith.addf %49, %55 : vector<256x64xf32>
    %c0_56 = arith.constant 0 : index
    %c2_57 = arith.constant 2 : index
    %c2_58 = arith.constant 2 : index
    %c0_59 = arith.constant 0 : index
    %57 = vector.load %arg1[%c0_56, %c2_57, %c2_58, %c0_59] : memref<1x18x18x3xf32, #tpu.memory_space<vmem>>, vector<1x16x16x3xf32>
    %58 = vector.shape_cast %57 : vector<1x16x16x3xf32> to vector<16x16x3xf32>
    %59 = vector.shape_cast %58 : vector<16x16x3xf32> to vector<256x3xf32>
    %c8 = arith.constant 8 : index
    %c0_60 = arith.constant 0 : index
    %c0_61 = arith.constant 0 : index
    %60 = vector.load %arg2[%c8, %c0_60, %c0_61] : memref<9x3x64xf32, #tpu.memory_space<vmem>>, vector<1x3x64xf32>
    %61 = vector.shape_cast %60 : vector<1x3x64xf32> to vector<3x64xf32>
    %cst_62 = arith.constant dense<0.000000e+00> : vector<256x64xf32>
    %62 = tpu.matmul %59, %61, %cst_62 {dimension_numbers = #tpu.dot_dimension_numbers<[1], [0], [0], [1], [0, 0, 1, 1], [], []>} : vector<256x3xf32>, vector<3x64xf32>, vector<256x64xf32> -> vector<256x64xf32>
    %63 = arith.addf %56, %62 : vector<256x64xf32>
    %c0_63 = arith.constant 0 : index
    %c0_64 = arith.constant 0 : index
    %64 = vector.load %arg3[%c0_63, %c0_64] : memref<1x64xf32, #tpu.memory_space<vmem>>, vector<1x64xf32>
    %65 = vector.broadcast %64 : vector<1x64xf32> to vector<256x64xf32>
    %66 = arith.mulf %63, %65 : vector<256x64xf32>
    %c0_65 = arith.constant 0 : index
    %c0_66 = arith.constant 0 : index
    %67 = vector.load %arg4[%c0_65, %c0_66] : memref<1x64xf32, #tpu.memory_space<vmem>>, vector<1x64xf32>
    %68 = vector.broadcast %67 : vector<1x64xf32> to vector<256x64xf32>
    %69 = arith.addf %66, %68 : vector<256x64xf32>
    %cst_67 = arith.constant 0.000000e+00 : f32
    %70 = vector.broadcast %cst_67 : f32 to vector<256x64xf32>
    %71 = arith.maximumf %69, %70 : vector<256x64xf32>
    %72 = vector.shape_cast %71 : vector<256x64xf32> to vector<8x32x64xf32>
    %73 = vector.extract_strided_slice %72 {offsets = [0, 0, 0], sizes = [8, 16, 64], strides = [1, 1, 1]} : vector<8x32x64xf32> to vector<8x16x64xf32>
    %74 = vector.extract_strided_slice %72 {offsets = [0, 16, 0], sizes = [8, 16, 64], strides = [1, 1, 1]} : vector<8x32x64xf32> to vector<8x16x64xf32>
    %75 = arith.maximumf %73, %74 : vector<8x16x64xf32>
    %c0_68 = arith.constant 0 : index
    %c0_69 = arith.constant 0 : index
    %c0_70 = arith.constant 0 : index
    %76 = vector.load %arg6[%c0_68, %c0_69, %c0_70] : memref<8x16x64xf32, #tpu.memory_space<vmem>>, vector<8x16x64xf32>
    tpu.vector_store %arg6[%c0_68, %c0_69, %c0_70], %75 {strides = array<i32>} : memref<8x16x64xf32, #tpu.memory_space<vmem>>, vector<8x16x64xf32>,
    %c0_71 = arith.constant 0 : index
    %c0_72 = arith.constant 0 : index
    %c0_73 = arith.constant 0 : index
    %77 = tpu.strided_load %arg6[%c0_71, %c0_72, %c0_73] {strides = array<i32: 1, 2, 1>} : memref<8x16x64xf32, #tpu.memory_space<vmem>>, vector<8x8x64xf32>
    %c0_74 = arith.constant 0 : index
    %c1_75 = arith.constant 1 : index
    %c0_76 = arith.constant 0 : index
    %78 = tpu.strided_load %arg6[%c0_74, %c1_75, %c0_76] {strides = array<i32: 1, 2, 1>} : memref<8x16x64xf32, #tpu.memory_space<vmem>>, vector<8x8x64xf32>
    %79 = arith.maximumf %77, %78 : vector<8x8x64xf32>
    %80 = vector.shape_cast %79 : vector<8x8x64xf32> to vector<1x8x8x64xf32>
    %c0_77 = arith.constant 0 : index
    %c0_78 = arith.constant 0 : index
    %c0_79 = arith.constant 0 : index
    %c0_80 = arith.constant 0 : index
    %81 = vector.load %arg5[%c0_77, %c0_78, %c0_79, %c0_80] : memref<1x8x8x64xf32, #tpu.memory_space<vmem>>, vector<1x8x8x64xf32>
    tpu.vector_store %arg5[%c0_77, %c0_78, %c0_79, %c0_80], %80 {strides = array<i32>} : memref<1x8x8x64xf32, #tpu.memory_space<vmem>>, vector<1x8x8x64xf32>,
    return
  }
  func.func @transform_0(%arg0: i32) -> (i32, i32, i32, i32) {
    %c0_i32 = arith.constant 0 : i32
    %c0_i32_0 = arith.constant 0 : i32
    %c0_i32_1 = arith.constant 0 : i32
    %c0_i32_2 = arith.constant 0 : i32
    return %arg0, %c0_i32, %c0_i32_0, %c0_i32_1 : i32, i32, i32, i32
  }
  func.func @transform_1(%arg0: i32) -> (i32, i32, i32) {
    %c0_i32 = arith.constant 0 : i32
    %c0_i32_0 = arith.constant 0 : i32
    %c0_i32_1 = arith.constant 0 : i32
    %c0_i32_2 = arith.constant 0 : i32
    return %c0_i32, %c0_i32_0, %c0_i32_1 : i32, i32, i32
  }
  func.func @transform_2(%arg0: i32) -> (i32, i32) {
    %c0_i32 = arith.constant 0 : i32
    %c0_i32_0 = arith.constant 0 : i32
    %c0_i32_1 = arith.constant 0 : i32
    return %c0_i32, %c0_i32_0 : i32, i32
  }
  func.func @transform_3(%arg0: i32) -> (i32, i32) {
    %c0_i32 = arith.constant 0 : i32
    %c0_i32_0 = arith.constant 0 : i32
    %c0_i32_1 = arith.constant 0 : i32
    return %c0_i32, %c0_i32_0 : i32, i32
  }
  func.func @transform_4(%arg0: i32) -> (i32, i32, i32, i32) {
    %c0_i32 = arith.constant 0 : i32
    %c0_i32_0 = arith.constant 0 : i32
    %c0_i32_1 = arith.constant 0 : i32
    %c0_i32_2 = arith.constant 0 : i32
    return %arg0, %c0_i32, %c0_i32_0, %c0_i32_1 : i32, i32, i32, i32
  }
}

</mosaic_0001>

<llo_original>
// kernel: tpu_custom_call.1
$region0: #{tpu_custom_call.1}
  #allocation0 [shape = 'u32[]', space=smem, size = 0x4, offset = 0x4, fixed_abs, tag = 'smem constant byte address 0x4 - core index']
  #allocation1 [shape = 'u32[72,128]{1,0:T(1,128)}', space=vmem, size = 0x9000, scoped, tag = 'internal scratch']
  #allocation2 [shape = 'f32[8,16,64]{2,1,0:T(8,128)}', space=vmem, size = 0x10000, scoped, tag = 'scratch operand']
  %s0 = inlined_call_operand.vmem [shape: f32[2,18,18,3], index: 0, kind: input, shape index: {}]
  %s1 = inlined_call_operand.vmem [shape: f32[9,3,64], index: 1, kind: input, shape index: {}]
  %s2 = inlined_call_operand.vmem [shape: f32[1,64], index: 2, kind: input, shape index: {}]
  %s3 = inlined_call_operand.vmem [shape: f32[1,64], index: 3, kind: input, shape index: {}]
  %s4 = inlined_call_operand.hbm [shape: f32[2,8,8,64], index: 4, kind: output, shape index: {}]
  %s5 = sld [smem:[#allocation0]]
  $region49: #{tpu_custom_call.1} parent=0
    _
  %s7 = ssub.s32 1, %s5
  %s8 = scalar_select 0, %s7, %s5
  $region1: #{tpu_custom_call.1} parent=0
    #allocation3 [shape = 'u8[65536]{0}', space=vmem, size = 0x10000, scoped, tag = 'output window, operand 0']
    #allocation4 [shape = 's32[2]{0}', space=sflag, size = 0x8, scoped, tag = 'scoped memory for tpu_custom_call.1']
    %9 = vsyncpa [#allocation4], 0
    %s10 = scalar_lea.sflag [#allocation4], 1
    %11 = vsyncpa %s10, 0
    loop: start=0, step=1, limit=4
    $region2: #{tpu_custom_call.1} parent=1 // loop_pre_header
      _
    $region3: #{tpu_custom_call.1} parent=1 // loop_header
      %s13 = sphi 0, %s17
      %p14 = scmp.ge.s32.totalorder %s13, 4
      %s23 = sphi 0, %s25
      %s26 = sphi 0, %s23
      %s27 = sphi 0, %s26
      %s43 = sphi 0, %s27
      %s47 = sphi 0, %s47
      %s49 = sphi 0, %s47
      %s50 = sphi 0, %s49
      %s64 = sphi 0, %s50
      %s68 = sphi 0, %s68
      %s70 = sphi 0, %s68
      %s71 = sphi 0, %s70
      %s85 = sphi 0, %s71
      %s89 = sphi 0, %s89
      %s91 = sphi 0, %s89
      %s92 = sphi 0, %s91
      %s106 = sphi 0, %s92
      %s112 = sphi 0, %s114
      %s115 = sphi 0, %s112
      %s116 = sphi 0, %s115
      %s132 = sphi 0, %s116
    $region4: #{tpu_custom_call.1} parent=1 // loop_header_branch
      %16 = sbr.rel (%p14) target = $region8
    $region5: #{tpu_custom_call.1} parent=1 // loop_body
      %s18 = ssub.s32 %s13, 1
      %s19 = ssub.s32 %s13, 2
      %s20 = sadd.s32 %s13, 1
      %s21 = ssub.s32 %s13, %s20
      %p22 = scmp.eq.s32.totalorder %s21, 0
      %s24 = sadd.s32 %s23, 1
      %s25 = scalar_select %p22, %s23, %s24
      %p28 = pneg %p22
      %p29 = scmp.eq.s32.totalorder %s13, 1
      %p30 = por %p28, %p29
      %p31 = scmp.ne.s32.totalorder %s23, %s26
      %p32 = scmp.eq.s32.totalorder %s13, 0
      %p33 = por %p31, %p32
      %p34 = scmp.ne.s32.totalorder %s23, %s26
      %p35 = scmp.eq.s32.totalorder %s18, 1
      %p36 = por %p34, %p35
      %p37 = scmp.ne.s32.totalorder %s26, %s27
      %p38 = scmp.eq.s32.totalorder %s18, 0
      %p39 = por %p37, %p38
      %p40 = scmp.ne.s32.totalorder %s26, %s27
      %p41 = scmp.eq.s32.totalorder %s19, 1
      %p42 = por %p40, %p41
      %p44 = scmp.ne.s32.totalorder %s27, %s43
      %p45 = scmp.eq.s32.totalorder %s19, 0
      %p46 = por %p44, %p45
      %s48 = sadd.s32 %s47, 1
      %p51 = scmp.eq.s32.totalorder %s13, 1
      %p52 = scmp.ne.s32.totalorder %s47, %s49
      %p53 = scmp.eq.s32.totalorder %s13, 0
      %p54 = por %p52, %p53
      %p55 = scmp.ne.s32.totalorder %s47, %s49
      %p56 = scmp.eq.s32.totalorder %s18, 1
      %p57 = por %p55, %p56
      %p58 = scmp.ne.s32.totalorder %s49, %s50
      %p59 = scmp.eq.s32.totalorder %s18, 0
      %p60 = por %p58, %p59
      %p61 = scmp.ne.s32.totalorder %s49, %s50
      %p62 = scmp.eq.s32.totalorder %s19, 1
      %p63 = por %p61, %p62
      %p65 = scmp.ne.s32.totalorder %s50, %s64
      %p66 = scmp.eq.s32.totalorder %s19, 0
      %p67 = por %p65, %p66
      %s69 = sadd.s32 %s68, 1
      %p72 = scmp.eq.s32.totalorder %s13, 1
      %p73 = scmp.ne.s32.totalorder %s68, %s70
      %p74 = scmp.eq.s32.totalorder %s13, 0
      %p75 = por %p73, %p74
      %p76 = scmp.ne.s32.totalorder %s68, %s70
      %p77 = scmp.eq.s32.totalorder %s18, 1
      %p78 = por %p76, %p77
      %p79 = scmp.ne.s32.totalorder %s70, %s71
      %p80 = scmp.eq.s32.totalorder %s18, 0
      %p81 = por %p79, %p80
      %p82 = scmp.ne.s32.totalorder %s70, %s71
      %p83 = scmp.eq.s32.totalorder %s19, 1
      %p84 = por %p82, %p83
      %p86 = scmp.ne.s32.totalorder %s71, %s85
      %p87 = scmp.eq.s32.totalorder %s19, 0
      %p88 = por %p86, %p87
      %s90 = sadd.s32 %s89, 1
      %p93 = scmp.eq.s32.totalorder %s13, 1
      %p94 = scmp.ne.s32.totalorder %s89, %s91
      %p95 = scmp.eq.s32.totalorder %s13, 0
      %p96 = por %p94, %p95
      %p97 = scmp.ne.s32.totalorder %s89, %s91
      %p98 = scmp.eq.s32.totalorder %s18, 1
      %p99 = por %p97, %p98
      %p100 = scmp.ne.s32.totalorder %s91, %s92
      %p101 = scmp.eq.s32.totalorder %s18, 0
      %p102 = por %p100, %p101
      %p103 = scmp.ne.s32.totalorder %s91, %s92
      %p104 = scmp.eq.s32.totalorder %s19, 1
      %p105 = por %p103, %p104
      %p107 = scmp.ne.s32.totalorder %s92, %s106
      %p108 = scmp.eq.s32.totalorder %s19, 0
      %p109 = por %p107, %p108
      %s110 = ssub.s32 %s13, %s20
      %p111 = scmp.eq.s32.totalorder %s110, 0
      %s113 = sadd.s32 %s112, 1
      %s114 = scalar_select %p111, %s112, %s113
      %p117 = pneg %p111
      %p118 = scmp.eq.s32.totalorder %s13, 1
      %p119 = por %p117, %p118
      %p120 = scmp.ne.s32.totalorder %s112, %s115
      %p121 = scmp.eq.s32.totalorder %s13, 0
      %p122 = por %p120, %p121
      %p123 = scmp.ne.s32.totalorder %s112, %s115
      %p124 = scmp.eq.s32.totalorder %s18, 1
      %p125 = por %p123, %p124
      %p126 = scmp.ne.s32.totalorder %s115, %s116
      %p127 = scmp.eq.s32.totalorder %s18, 0
      %p128 = por %p126, %p127
      %p129 = scmp.ne.s32.totalorder %s115, %s116
      %p130 = scmp.eq.s32.totalorder %s19, 1
      %p131 = por %p129, %p130
      %p133 = scmp.ne.s32.totalorder %s116, %s132
      %p134 = scmp.eq.s32.totalorder %s19, 0
      %p135 = por %p133, %p134
      %p136 = scmp.le.s32.totalorder 1, %s13
      %p137 = scmp.lt.s32.totalorder %s13, 3
      %p138 = pnand %p136, %p137
      %p139 = pneg %p138
      // Predicated region
      $region9: #{tpu_custom_call.1} parent=5 // pred_check
        _
      $region10: #{tpu_custom_call.1} parent=5 // pred_check_branch
        %141 = sbr.rel (%p138) target = $region12
      $region11: #{tpu_custom_call.1} parent=5 // pred_region
        %s142 = ssub.s32 %s13, 1
        // Predicated region
        $region13: #{tpu_custom_call.1} parent=11 // pred_check
          %p143 = pneg %p60
        $region14: #{tpu_custom_call.1} parent=11 // pred_check_branch
          %145 = sbr.rel (%p143) target = $region16
        $region15: #{tpu_custom_call.1} parent=11 // pred_region
          _
        $region16: #{tpu_custom_call.1} parent=11 // pred_fallthru
          _
        // Predicated region
        $region17: #{tpu_custom_call.1} parent=11 // pred_check
          %p146 = pneg %p81
        $region18: #{tpu_custom_call.1} parent=11 // pred_check_branch
          %148 = sbr.rel (%p146) target = $region20
        $region19: #{tpu_custom_call.1} parent=11 // pred_region
          _
        $region20: #{tpu_custom_call.1} parent=11 // pred_fallthru
          _
        // Predicated region
        $region21: #{tpu_custom_call.1} parent=11 // pred_check
          %p149 = pneg %p102
        $region22: #{tpu_custom_call.1} parent=11 // pred_check_branch
          %151 = sbr.rel (%p149) target = $region24
        $region23: #{tpu_custom_call.1} parent=11 // pred_region
          _
        $region24: #{tpu_custom_call.1} parent=11 // pred_fallthru
          _
      $region12: #{tpu_custom_call.1} parent=5 // pred_fallthru
        _
      %p152 = scmp.lt.s32.totalorder %s13, 2
      // Predicated region
      $region25: #{tpu_custom_call.1} parent=5 // pred_check
        %p153 = pneg %p152
      $region26: #{tpu_custom_call.1} parent=5 // pred_check_branch
        %155 = sbr.rel (%p153) target = $region28
      $region27: #{tpu_custom_call.1} parent=5 // pred_region
        // Predicated region
        $region29: #{tpu_custom_call.1} parent=27 // pred_check
          %p156 = pneg %p33
        $region30: #{tpu_custom_call.1} parent=27 // pred_check_branch
          %158 = sbr.rel (%p156) target = $region32
        $region31: #{tpu_custom_call.1} parent=27 // pred_region
          %p159 = scmp.lt.s32.totalorder %s13, 1
          %s160 = scalar_select %p159, %s13, 1
          %s161 = smul.addr %s160, 54
          %s162 = smul.addr %s161, 8
          %s163 = scalar_lea.vmem %s0, %s162
        $region32: #{tpu_custom_call.1} parent=27 // pred_fallthru
          _
      $region28: #{tpu_custom_call.1} parent=5 // pred_fallthru
        _
      %p164 = scmp.le.s32.totalorder 1, %s13
      %p165 = scmp.lt.s32.totalorder %s13, 3
      %p166 = pnand %p164, %p165
      %p167 = pneg %p166
      // Predicated region
      $region33: #{tpu_custom_call.1} parent=5 // pred_check
        _
      $region34: #{tpu_custom_call.1} parent=5 // pred_check_branch
        %169 = sbr.rel (%p166) target = $region36
      $region35: #{tpu_custom_call.1} parent=5 // pred_region
        %s170 = ssub.s32 %s13, 1
        %p171 = scmp.lt.s32.totalorder %s18, 1
        %s172 = scalar_select %p171, %s18, 1
        %s173 = smul.addr %s172, 54
        %s174 = smul.addr %s173, 8
        %s175 = scalar_lea.vmem %s0, %s174
        %p176 = pneg %p39
        %p177 = pneg %p36
        %p178 = pneg %p60
        %p179 = pneg %p57
        %p180 = pneg %p81
        %p181 = pneg %p78
        %p182 = pneg %p102
        %p183 = pneg %p99
        %p184 = pneg %p128
        %p185 = pneg %p125
        %s186 = sand.u32 %s115, 1
        %s187 = scalar_lea.sflag [#allocation4], %s186
        %s188 = sand.u32 %s115, 1
        %s189 = smul.addr %s188, 64
        %s190 = scalar_lea.vmem [#allocation3], %s189
        %p191 = scmp.lt.s32.totalorder %s18, 1
        %s192 = scalar_select %p191, %s18, 1
        %s193 = smul.addr %s192, 54
        %s194 = smul.addr %s193, 8
        %s195 = scalar_lea.vmem %s0, %s194
        %v196 = vld [vmem:[%s195] sm:$0xff]
        %v197 = vld [vmem:[%s195 + $0x8] sm:$0xff]
        %v198 = vld [vmem:[%s195 + $0x18] sm:$0xff]
        %v199 = vld [vmem:[%s195 + $0x20] sm:$0xff]
        %v200 = vld [vmem:[%s195 + $0x30] sm:$0xff]
        %v201 = vld [vmem:[%s195 + $0x38] sm:$0xff]
        %v202 = vld [vmem:[%s195 + $0x48] sm:$0xff]
        %v203 = vld [vmem:[%s195 + $0x50] sm:$0xff]
        %v204 = vld [vmem:[%s195 + $0x60] sm:$0xff]
        %v205 = vld [vmem:[%s195 + $0x68] sm:$0xff]
        %v206 = vld [vmem:[%s195 + $0x78] sm:$0xff]
        %v207 = vld [vmem:[%s195 + $0x80] sm:$0xff]
        %v208 = vld [vmem:[%s195 + $0x90] sm:$0xff]
        %v209 = vld [vmem:[%s195 + $0x98] sm:$0xff]
        %v210 = vld [vmem:[%s195 + $0xa8] sm:$0xff]
        %v211 = vld [vmem:[%s195 + $0xb0] sm:$0xff]
        %v212 = vld [vmem:[%s195 + $0xc0] sm:$0xff]
        %v213 = vld [vmem:[%s195 + $0xc8] sm:$0xff]
        %v214 = vld [vmem:[%s195 + $0xd8] sm:$0xff]
        %v215 = vld [vmem:[%s195 + $0xe0] sm:$0xff]
        %v216 = vld [vmem:[%s195 + $0xf0] sm:$0xff]
        %v217 = vld [vmem:[%s195 + $0xf8] sm:$0xff]
        %v218 = vld [vmem:[%s195 + $0x108] sm:$0xff]
        %v219 = vld [vmem:[%s195 + $0x110] sm:$0xff]
        %v220 = vld [vmem:[%s195 + $0x120] sm:$0xff]
        %v221 = vld [vmem:[%s195 + $0x128] sm:$0xff]
        %v222 = vld [vmem:[%s195 + $0x138] sm:$0xff]
        %v223 = vld [vmem:[%s195 + $0x140] sm:$0xff]
        %v224 = vld [vmem:[%s195 + $0x150] sm:$0xff]
        %v225 = vld [vmem:[%s195 + $0x158] sm:$0xff]
        %v226 = vld [vmem:[%s195 + $0x168] sm:$0xff]
        %v227 = vld [vmem:[%s195 + $0x170] sm:$0xff]
        %v228 = vld [vmem:[%s1] sm:$0x7]
        %v229 = vld [vmem:[%s195 + $0x1] sm:$0xff]
        %v230 = vld [vmem:[%s195 + $0x9] sm:$0xff]
        %v231 = vld [vmem:[%s195 + $0x19] sm:$0xff]
        %v232 = vld [vmem:[%s195 + $0x21] sm:$0xff]
        %v233 = vld [vmem:[%s195 + $0x31] sm:$0xff]
        %v234 = vld [vmem:[%s195 + $0x39] sm:$0xff]
        %v235 = vld [vmem:[%s195 + $0x49] sm:$0xff]
        %v236 = vld [vmem:[%s195 + $0x51] sm:$0xff]
        %v237 = vld [vmem:[%s195 + $0x61] sm:$0xff]
        %v238 = vld [vmem:[%s195 + $0x69] sm:$0xff]
        %v239 = vld [vmem:[%s195 + $0x79] sm:$0xff]
        %v240 = vld [vmem:[%s195 + $0x81] sm:$0xff]
        %v241 = vld [vmem:[%s195 + $0x91] sm:$0xff]
        %v242 = vld [vmem:[%s195 + $0x99] sm:$0xff]
        %v243 = vld [vmem:[%s195 + $0xa9] sm:$0xff]
        %v244 = vld [vmem:[%s195 + $0xb1] sm:$0xff]
        %v245 = vld [vmem:[%s195 + $0xc1] sm:$0xff]
        %v246 = vld [vmem:[%s195 + $0xc9] sm:$0xff]
        %v247 = vld [vmem:[%s195 + $0xd9] sm:$0xff]
        %v248 = vld [vmem:[%s195 + $0xe1] sm:$0xff]
        %v249 = vld [vmem:[%s195 + $0xf1] sm:$0xff]
        %v250 = vld [vmem:[%s195 + $0xf9] sm:$0xff]
        %v251 = vld [vmem:[%s195 + $0x109] sm:$0xff]
        %v252 = vld [vmem:[%s195 + $0x111] sm:$0xff]
        %v253 = vld [vmem:[%s195 + $0x121] sm:$0xff]
        %v254 = vld [vmem:[%s195 + $0x129] sm:$0xff]
        %v255 = vld [vmem:[%s195 + $0x139] sm:$0xff]
        %v256 = vld [vmem:[%s195 + $0x141] sm:$0xff]
        %v257 = vld [vmem:[%s195 + $0x151] sm:$0xff]
        %v258 = vld [vmem:[%s195 + $0x159] sm:$0xff]
        %v259 = vld [vmem:[%s195 + $0x169] sm:$0xff]
        %v260 = vld [vmem:[%s195 + $0x171] sm:$0xff]
        %s261 = scalar_lea.vmem %s1, 4
        %v262 = vld [vmem:[%s261] sm:$0x7]
        %vm263 = vcmask 23552
        %v265 = vsel %vm263, %v229, 0
        %v268 = vsel %vm263, %v230, 0
        %v271 = vsel %vm263, %v231, 0
        %v274 = vsel %vm263, %v232, 0
        %v277 = vsel %vm263, %v233, 0
        %v280 = vsel %vm263, %v234, 0
        %v283 = vsel %vm263, %v235, 0
        %v286 = vsel %vm263, %v236, 0
        %v289 = vsel %vm263, %v237, 0
        %v292 = vsel %vm263, %v238, 0
        %v295 = vsel %vm263, %v239, 0
        %v298 = vsel %vm263, %v240, 0
        %v301 = vsel %vm263, %v241, 0
        %v304 = vsel %vm263, %v242, 0
        %v307 = vsel %vm263, %v243, 0
        %v310 = vsel %vm263, %v244, 0
        %v313 = vsel %vm263, %v245, 0
        %v316 = vsel %vm263, %v246, 0
        %v319 = vsel %vm263, %v247, 0
        %v322 = vsel %vm263, %v248, 0
        %v325 = vsel %vm263, %v249, 0
        %v328 = vsel %vm263, %v250, 0
        %v331 = vsel %vm263, %v251, 0
        %v334 = vsel %vm263, %v252, 0
        %v337 = vsel %vm263, %v253, 0
        %v340 = vsel %vm263, %v254, 0
        %v343 = vsel %vm263, %v255, 0
        %v346 = vsel %vm263, %v256, 0
        %v349 = vsel %vm263, %v257, 0
        %v352 = vsel %vm263, %v258, 0
        %v355 = vsel %vm263, %v259, 0
        %v358 = vsel %vm263, %v260, 0
        %vm360 = vcmask 1042432
        %v362 = vsel %vm360, %v262, 0
        %364 = vmatpush.msra.mxu0 0.0
        %365 = vmatpush.msra.mxu0 0.0
        %366 = vmatpush.msra.mxu0 0.0
        %367 = vmatpush.msra.mxu0 0.0
        %368 = vmatpush.msra.mxu0 0.0
        %369 = vmatpush.msra.mxu0 0.0
        %370 = vmatpush.msra.mxu0 0.0
        %371 = vmatpush.msra.mxu0 0.0
        %372 = vmatpush.msra.mxu0 0.0
        %373 = vmatpush.msra.mxu0 0.0
        %374 = vmatpush.msra.mxu0 0.0
        %375 = vmatpush.msra.mxu0 0.0
        %376 = vmatpush.msra.mxu0 0.0
        %377 = vmatpush.msra.mxu0 0.0
        %378 = vmatpush.msra.mxu0 0.0
        %379 = vmatpush.msra.mxu0 %v362
        %380 = vmatmul.f32.gmra.mxu0 %v265
        %v381 = vpop.f32.mrf.mxu0
        %v382 = vadd.f32 0.0, %v381
        %383 = vmatmul.f32.gmra.mxu0 %v268
        %v384 = vpop.f32.mrf.mxu0
        %v385 = vadd.f32 0.0, %v384
        %386 = vmatmul.f32.gmra.mxu0 %v271
        %v387 = vpop.f32.mrf.mxu0
        %v388 = vadd.f32 0.0, %v387
        %389 = vmatmul.f32.gmra.mxu0 %v274
        %v390 = vpop.f32.mrf.mxu0
        %v391 = vadd.f32 0.0, %v390
        %392 = vmatmul.f32.gmra.mxu0 %v277
        %v393 = vpop.f32.mrf.mxu0
        %v394 = vadd.f32 0.0, %v393
        %395 = vmatmul.f32.gmra.mxu0 %v280
        %v396 = vpop.f32.mrf.mxu0
        %v397 = vadd.f32 0.0, %v396
        %398 = vmatmul.f32.gmra.mxu0 %v283
        %v399 = vpop.f32.mrf.mxu0
        %v400 = vadd.f32 0.0, %v399
        %401 = vmatmul.f32.gmra.mxu0 %v286
        %v402 = vpop.f32.mrf.mxu0
        %v403 = vadd.f32 0.0, %v402
        %404 = vmatmul.f32.gmra.mxu0 %v289
        %v405 = vpop.f32.mrf.mxu0
        %v406 = vadd.f32 0.0, %v405
        %407 = vmatmul.f32.gmra.mxu0 %v292
        %v408 = vpop.f32.mrf.mxu0
        %v409 = vadd.f32 0.0, %v408
        %410 = vmatmul.f32.gmra.mxu0 %v295
        %v411 = vpop.f32.mrf.mxu0
        %v412 = vadd.f32 0.0, %v411
        %413 = vmatmul.f32.gmra.mxu0 %v298
        %v414 = vpop.f32.mrf.mxu0
        %v415 = vadd.f32 0.0, %v414
        %416 = vmatmul.f32.gmra.mxu0 %v301
        %v417 = vpop.f32.mrf.mxu0
        %v418 = vadd.f32 0.0, %v417
        %419 = vmatmul.f32.gmra.mxu0 %v304
        %v420 = vpop.f32.mrf.mxu0
        %v421 = vadd.f32 0.0, %v420
        %422 = vmatmul.f32.gmra.mxu0 %v307
        %v423 = vpop.f32.mrf.mxu0
        %v424 = vadd.f32 0.0, %v423
        %425 = vmatmul.f32.gmra.mxu0 %v310
        %v426 = vpop.f32.mrf.mxu0
        %v427 = vadd.f32 0.0, %v426
        %428 = vmatmul.f32.gmra.mxu0 %v313
        %v429 = vpop.f32.mrf.mxu0
        %v430 = vadd.f32 0.0, %v429
        %431 = vmatmul.f32.gmra.mxu0 %v316
        %v432 = vpop.f32.mrf.mxu0
        %v433 = vadd.f32 0.0, %v432
        %434 = vmatmul.f32.gmra.mxu0 %v319
        %v435 = vpop.f32.mrf.mxu0
        %v436 = vadd.f32 0.0, %v435
        %437 = vmatmul.f32.gmra.mxu0 %v322
        %v438 = vpop.f32.mrf.mxu0
        %v439 = vadd.f32 0.0, %v438
        %440 = vmatmul.f32.gmra.mxu0 %v325
        %v441 = vpop.f32.mrf.mxu0
        %v442 = vadd.f32 0.0, %v441
        %443 = vmatmul.f32.gmra.mxu0 %v328
        %v444 = vpop.f32.mrf.mxu0
        %v445 = vadd.f32 0.0, %v444
        %446 = vmatmul.f32.gmra.mxu0 %v331
        %v447 = vpop.f32.mrf.mxu0
        %v448 = vadd.f32 0.0, %v447
        %449 = vmatmul.f32.gmra.mxu0 %v334
        %v450 = vpop.f32.mrf.mxu0
        %v451 = vadd.f32 0.0, %v450
        %452 = vmatmul.f32.gmra.mxu0 %v337
        %v453 = vpop.f32.mrf.mxu0
        %v454 = vadd.f32 0.0, %v453
        %455 = vmatmul.f32.gmra.mxu0 %v340
        %v456 = vpop.f32.mrf.mxu0
        %v457 = vadd.f32 0.0, %v456
        %458 = vmatmul.f32.gmra.mxu0 %v343
        %v459 = vpop.f32.mrf.mxu0
        %v460 = vadd.f32 0.0, %v459
        %461 = vmatmul.f32.gmra.mxu0 %v346
        %v462 = vpop.f32.mrf.mxu0
        %v463 = vadd.f32 0.0, %v462
        %464 = vmatmul.f32.gmra.mxu0 %v349
        %v465 = vpop.f32.mrf.mxu0
        %v466 = vadd.f32 0.0, %v465
        %467 = vmatmul.f32.gmra.mxu0 %v352
        %v468 = vpop.f32.mrf.mxu0
        %v469 = vadd.f32 0.0, %v468
        %470 = vmatmul.f32.gmra.mxu0 %v355
        %v471 = vpop.f32.mrf.mxu0
        %v472 = vadd.f32 0.0, %v471
        %473 = vmatmul.f32.gmra.mxu0 %v358
        %v474 = vpop.f32.mrf.mxu0
        %v475 = vadd.f32 0.0, %v474
        %476 = vdwg.mxu0
        %v478 = vsel %vm263, %v196, 0
        %v481 = vsel %vm263, %v197, 0
        %v484 = vsel %vm263, %v198, 0
        %v487 = vsel %vm263, %v199, 0
        %v490 = vsel %vm263, %v200, 0
        %v493 = vsel %vm263, %v201, 0
        %v496 = vsel %vm263, %v202, 0
        %v499 = vsel %vm263, %v203, 0
        %v502 = vsel %vm263, %v204, 0
        %v505 = vsel %vm263, %v205, 0
        %v508 = vsel %vm263, %v206, 0
        %v511 = vsel %vm263, %v207, 0
        %v514 = vsel %vm263, %v208, 0
        %v517 = vsel %vm263, %v209, 0
        %v520 = vsel %vm263, %v210, 0
        %v523 = vsel %vm263, %v211, 0
        %v526 = vsel %vm263, %v212, 0
        %v529 = vsel %vm263, %v213, 0
        %v532 = vsel %vm263, %v214, 0
        %v535 = vsel %vm263, %v215, 0
        %v538 = vsel %vm263, %v216, 0
        %v541 = vsel %vm263, %v217, 0
        %v544 = vsel %vm263, %v218, 0
        %v547 = vsel %vm263, %v219, 0
        %v550 = vsel %vm263, %v220, 0
        %v553 = vsel %vm263, %v221, 0
        %v556 = vsel %vm263, %v222, 0
        %v559 = vsel %vm263, %v223, 0
        %v562 = vsel %vm263, %v224, 0
        %v565 = vsel %vm263, %v225, 0
        %v568 = vsel %vm263, %v226, 0
        %v571 = vsel %vm263, %v227, 0
        %v574 = vsel %vm360, %v228, 0
        %576 = vmatpush.msra.mxu0 0.0
        %577 = vmatpush.msra.mxu0 0.0
        %578 = vmatpush.msra.mxu0 0.0
        %579 = vmatpush.msra.mxu0 0.0
        %580 = vmatpush.msra.mxu0 0.0
        %581 = vmatpush.msra.mxu0 0.0
        %582 = vmatpush.msra.mxu0 0.0
        %583 = vmatpush.msra.mxu0 0.0
        %584 = vmatpush.msra.mxu0 0.0
        %585 = vmatpush.msra.mxu0 0.0
        %586 = vmatpush.msra.mxu0 0.0
        %587 = vmatpush.msra.mxu0 0.0
        %588 = vmatpush.msra.mxu0 0.0
        %589 = vmatpush.msra.mxu0 0.0
        %590 = vmatpush.msra.mxu0 0.0
        %591 = vmatpush.msra.mxu0 %v574
        %592 = vmatmul.f32.gmra.mxu0 %v478
        %v593 = vpop.f32.mrf.mxu0
        %v594 = vadd.f32 %v382, %v593
        %595 = vmatmul.f32.gmra.mxu0 %v481
        %v596 = vpop.f32.mrf.mxu0
        %v597 = vadd.f32 %v385, %v596
        %598 = vmatmul.f32.gmra.mxu0 %v484
        %v599 = vpop.f32.mrf.mxu0
        %v600 = vadd.f32 %v388, %v599
        %601 = vmatmul.f32.gmra.mxu0 %v487
        %v602 = vpop.f32.mrf.mxu0
        %v603 = vadd.f32 %v391, %v602
        %604 = vmatmul.f32.gmra.mxu0 %v490
        %v605 = vpop.f32.mrf.mxu0
        %v606 = vadd.f32 %v394, %v605
        %607 = vmatmul.f32.gmra.mxu0 %v493
        %v608 = vpop.f32.mrf.mxu0
        %v609 = vadd.f32 %v397, %v608
        %610 = vmatmul.f32.gmra.mxu0 %v496
        %v611 = vpop.f32.mrf.mxu0
        %v612 = vadd.f32 %v400, %v611
        %613 = vmatmul.f32.gmra.mxu0 %v499
        %v614 = vpop.f32.mrf.mxu0
        %v615 = vadd.f32 %v403, %v614
        %616 = vmatmul.f32.gmra.mxu0 %v502
        %v617 = vpop.f32.mrf.mxu0
        %v618 = vadd.f32 %v406, %v617
        %619 = vmatmul.f32.gmra.mxu0 %v505
        %v620 = vpop.f32.mrf.mxu0
        %v621 = vadd.f32 %v409, %v620
        %622 = vmatmul.f32.gmra.mxu0 %v508
        %v623 = vpop.f32.mrf.mxu0
        %v624 = vadd.f32 %v412, %v623
        %625 = vmatmul.f32.gmra.mxu0 %v511
        %v626 = vpop.f32.mrf.mxu0
        %v627 = vadd.f32 %v415, %v626
        %628 = vmatmul.f32.gmra.mxu0 %v514
        %v629 = vpop.f32.mrf.mxu0
        %v630 = vadd.f32 %v418, %v629
        %631 = vmatmul.f32.gmra.mxu0 %v517
        %v632 = vpop.f32.mrf.mxu0
        %v633 = vadd.f32 %v421, %v632
        %634 = vmatmul.f32.gmra.mxu0 %v520
        %v635 = vpop.f32.mrf.mxu0
        %v636 = vadd.f32 %v424, %v635
        %637 = vmatmul.f32.gmra.mxu0 %v523
        %v638 = vpop.f32.mrf.mxu0
        %v639 = vadd.f32 %v427, %v638
        %640 = vmatmul.f32.gmra.mxu0 %v526
        %v641 = vpop.f32.mrf.mxu0
        %v642 = vadd.f32 %v430, %v641
        %643 = vmatmul.f32.gmra.mxu0 %v529
        %v644 = vpop.f32.mrf.mxu0
        %v645 = vadd.f32 %v433, %v644
        %646 = vmatmul.f32.gmra.mxu0 %v532
        %v647 = vpop.f32.mrf.mxu0
        %v648 = vadd.f32 %v436, %v647
        %649 = vmatmul.f32.gmra.mxu0 %v535
        %v650 = vpop.f32.mrf.mxu0
        %v651 = vadd.f32 %v439, %v650
        %652 = vmatmul.f32.gmra.mxu0 %v538
        %v653 = vpop.f32.mrf.mxu0
        %v654 = vadd.f32 %v442, %v653
        %655 = vmatmul.f32.gmra.mxu0 %v541
        %v656 = vpop.f32.mrf.mxu0
        %v657 = vadd.f32 %v445, %v656
        %658 = vmatmul.f32.gmra.mxu0 %v544
        %v659 = vpop.f32.mrf.mxu0
        %v660 = vadd.f32 %v448, %v659
        %661 = vmatmul.f32.gmra.mxu0 %v547
        %v662 = vpop.f32.mrf.mxu0
        %v663 = vadd.f32 %v451, %v662
        %664 = vmatmul.f32.gmra.mxu0 %v550
        %v665 = vpop.f32.mrf.mxu0
        %v666 = vadd.f32 %v454, %v665
        %667 = vmatmul.f32.gmra.mxu0 %v553
        %v668 = vpop.f32.mrf.mxu0
        %v669 = vadd.f32 %v457, %v668
        %670 = vmatmul.f32.gmra.mxu0 %v556
        %v671 = vpop.f32.mrf.mxu0
        %v672 = vadd.f32 %v460, %v671
        %673 = vmatmul.f32.gmra.mxu0 %v559
        %v674 = vpop.f32.mrf.mxu0
        %v675 = vadd.f32 %v463, %v674
        %676 = vmatmul.f32.gmra.mxu0 %v562
        %v677 = vpop.f32.mrf.mxu0
        %v678 = vadd.f32 %v466, %v677
        %679 = vmatmul.f32.gmra.mxu0 %v565
        %v680 = vpop.f32.mrf.mxu0
        %v681 = vadd.f32 %v469, %v680
        %682 = vmatmul.f32.gmra.mxu0 %v568
        %v683 = vpop.f32.mrf.mxu0
        %v684 = vadd.f32 %v472, %v683
        %685 = vmatmul.f32.gmra.mxu0 %v571
        %v686 = vpop.f32.mrf.mxu0
        %v687 = vadd.f32 %v475, %v686
        %688 = vdwg.mxu0
        %v689 = vld [vmem:[%s195 + $0x2] sm:$0xff]
        %v690 = vld [vmem:[%s195 + $0xa] sm:$0xff]
        %v691 = vld [vmem:[%s195 + $0x1a] sm:$0xff]
        %v692 = vld [vmem:[%s195 + $0x22] sm:$0xff]
        %v693 = vld [vmem:[%s195 + $0x32] sm:$0xff]
        %v694 = vld [vmem:[%s195 + $0x3a] sm:$0xff]
        %v695 = vld [vmem:[%s195 + $0x4a] sm:$0xff]
        %v696 = vld [vmem:[%s195 + $0x52] sm:$0xff]
        %v697 = vld [vmem:[%s195 + $0x62] sm:$0xff]
        %v698 = vld [vmem:[%s195 + $0x6a] sm:$0xff]
        %v699 = vld [vmem:[%s195 + $0x7a] sm:$0xff]
        %v700 = vld [vmem:[%s195 + $0x82] sm:$0xff]
        %v701 = vld [vmem:[%s195 + $0x92] sm:$0xff]
        %v702 = vld [vmem:[%s195 + $0x9a] sm:$0xff]
        %v703 = vld [vmem:[%s195 + $0xaa] sm:$0xff]
        %v704 = vld [vmem:[%s195 + $0xb2] sm:$0xff]
        %v705 = vld [vmem:[%s195 + $0xc2] sm:$0xff]
        %v706 = vld [vmem:[%s195 + $0xca] sm:$0xff]
        %v707 = vld [vmem:[%s195 + $0xda] sm:$0xff]
        %v708 = vld [vmem:[%s195 + $0xe2] sm:$0xff]
        %v709 = vld [vmem:[%s195 + $0xf2] sm:$0xff]
        %v710 = vld [vmem:[%s195 + $0xfa] sm:$0xff]
        %v711 = vld [vmem:[%s195 + $0x10a] sm:$0xff]
        %v712 = vld [vmem:[%s195 + $0x112] sm:$0xff]
        %v713 = vld [vmem:[%s195 + $0x122] sm:$0xff]
        %v714 = vld [vmem:[%s195 + $0x12a] sm:$0xff]
        %v715 = vld [vmem:[%s195 + $0x13a] sm:$0xff]
        %v716 = vld [vmem:[%s195 + $0x142] sm:$0xff]
        %v717 = vld [vmem:[%s195 + $0x152] sm:$0xff]
        %v718 = vld [vmem:[%s195 + $0x15a] sm:$0xff]
        %v719 = vld [vmem:[%s195 + $0x16a] sm:$0xff]
        %v720 = vld [vmem:[%s195 + $0x172] sm:$0xff]
        %s721 = scalar_lea.vmem %s1, 8
        %v722 = vld [vmem:[%s721] sm:$0x7]
        %v724 = vsel %vm263, %v689, 0
        %v727 = vsel %vm263, %v690, 0
        %v730 = vsel %vm263, %v691, 0
        %v733 = vsel %vm263, %v692, 0
        %v736 = vsel %vm263, %v693, 0
        %v739 = vsel %vm263, %v694, 0
        %v742 = vsel %vm263, %v695, 0
        %v745 = vsel %vm263, %v696, 0
        %v748 = vsel %vm263, %v697, 0
        %v751 = vsel %vm263, %v698, 0
        %v754 = vsel %vm263, %v699, 0
        %v757 = vsel %vm263, %v700, 0
        %v760 = vsel %vm263, %v701, 0
        %v763 = vsel %vm263, %v702, 0
        %v766 = vsel %vm263, %v703, 0
        %v769 = vsel %vm263, %v704, 0
        %v772 = vsel %vm263, %v705, 0
        %v775 = vsel %vm263, %v706, 0
        %v778 = vsel %vm263, %v707, 0
        %v781 = vsel %vm263, %v708, 0
        %v784 = vsel %vm263, %v709, 0
        %v787 = vsel %vm263, %v710, 0
        %v790 = vsel %vm263, %v711, 0
        %v793 = vsel %vm263, %v712, 0
        %v796 = vsel %vm263, %v713, 0
        %v799 = vsel %vm263, %v714, 0
        %v802 = vsel %vm263, %v715, 0
        %v805 = vsel %vm263, %v716, 0
        %v808 = vsel %vm263, %v717, 0
        %v811 = vsel %vm263, %v718, 0
        %v814 = vsel %vm263, %v719, 0
        %v817 = vsel %vm263, %v720, 0
        %v820 = vsel %vm360, %v722, 0
        %822 = vmatpush.msra.mxu0 0.0
        %823 = vmatpush.msra.mxu0 0.0
        %824 = vmatpush.msra.mxu0 0.0
        %825 = vmatpush.msra.mxu0 0.0
        %826 = vmatpush.msra.mxu0 0.0
        %827 = vmatpush.msra.mxu0 0.0
        %828 = vmatpush.msra.mxu0 0.0
        %829 = vmatpush.msra.mxu0 0.0
        %830 = vmatpush.msra.mxu0 0.0
        %831 = vmatpush.msra.mxu0 0.0
        %832 = vmatpush.msra.mxu0 0.0
        %833 = vmatpush.msra.mxu0 0.0
        %834 = vmatpush.msra.mxu0 0.0
        %835 = vmatpush.msra.mxu0 0.0
        %836 = vmatpush.msra.mxu0 0.0
        %837 = vmatpush.msra.mxu0 %v820
        %838 = vmatmul.f32.gmra.mxu0 %v724
        %v839 = vpop.f32.mrf.mxu0
        %v840 = vadd.f32 0.0, %v839
        %841 = vmatmul.f32.gmra.mxu0 %v727
        %v842 = vpop.f32.mrf.mxu0
        %v843 = vadd.f32 0.0, %v842
        %844 = vmatmul.f32.gmra.mxu0 %v730
        %v845 = vpop.f32.mrf.mxu0
        %v846 = vadd.f32 0.0, %v845
        %847 = vmatmul.f32.gmra.mxu0 %v733
        %v848 = vpop.f32.mrf.mxu0
        %v849 = vadd.f32 0.0, %v848
        %850 = vmatmul.f32.gmra.mxu0 %v736
        %v851 = vpop.f32.mrf.mxu0
        %v852 = vadd.f32 0.0, %v851
        %853 = vmatmul.f32.gmra.mxu0 %v739
        %v854 = vpop.f32.mrf.mxu0
        %v855 = vadd.f32 0.0, %v854
        %856 = vmatmul.f32.gmra.mxu0 %v742
        %v857 = vpop.f32.mrf.mxu0
        %v858 = vadd.f32 0.0, %v857
        %859 = vmatmul.f32.gmra.mxu0 %v745
        %v860 = vpop.f32.mrf.mxu0
        %v861 = vadd.f32 0.0, %v860
        %862 = vmatmul.f32.gmra.mxu0 %v748
        %v863 = vpop.f32.mrf.mxu0
        %v864 = vadd.f32 0.0, %v863
        %865 = vmatmul.f32.gmra.mxu0 %v751
        %v866 = vpop.f32.mrf.mxu0
        %v867 = vadd.f32 0.0, %v866
        %868 = vmatmul.f32.gmra.mxu0 %v754
        %v869 = vpop.f32.mrf.mxu0
        %v870 = vadd.f32 0.0, %v869
        %871 = vmatmul.f32.gmra.mxu0 %v757
        %v872 = vpop.f32.mrf.mxu0
        %v873 = vadd.f32 0.0, %v872
        %874 = vmatmul.f32.gmra.mxu0 %v760
        %v875 = vpop.f32.mrf.mxu0
        %v876 = vadd.f32 0.0, %v875
        %877 = vmatmul.f32.gmra.mxu0 %v763
        %v878 = vpop.f32.mrf.mxu0
        %v879 = vadd.f32 0.0, %v878
        %880 = vmatmul.f32.gmra.mxu0 %v766
        %v881 = vpop.f32.mrf.mxu0
        %v882 = vadd.f32 0.0, %v881
        %883 = vmatmul.f32.gmra.mxu0 %v769
        %v884 = vpop.f32.mrf.mxu0
        %v885 = vadd.f32 0.0, %v884
        %886 = vmatmul.f32.gmra.mxu0 %v772
        %v887 = vpop.f32.mrf.mxu0
        %v888 = vadd.f32 0.0, %v887
        %889 = vmatmul.f32.gmra.mxu0 %v775
        %v890 = vpop.f32.mrf.mxu0
        %v891 = vadd.f32 0.0, %v890
        %892 = vmatmul.f32.gmra.mxu0 %v778
        %v893 = vpop.f32.mrf.mxu0
        %v894 = vadd.f32 0.0, %v893
        %895 = vmatmul.f32.gmra.mxu0 %v781
        %v896 = vpop.f32.mrf.mxu0
        %v897 = vadd.f32 0.0, %v896
        %898 = vmatmul.f32.gmra.mxu0 %v784
        %v899 = vpop.f32.mrf.mxu0
        %v900 = vadd.f32 0.0, %v899
        %901 = vmatmul.f32.gmra.mxu0 %v787
        %v902 = vpop.f32.mrf.mxu0
        %v903 = vadd.f32 0.0, %v902
        %904 = vmatmul.f32.gmra.mxu0 %v790
        %v905 = vpop.f32.mrf.mxu0
        %v906 = vadd.f32 0.0, %v905
        %907 = vmatmul.f32.gmra.mxu0 %v793
        %v908 = vpop.f32.mrf.mxu0
        %v909 = vadd.f32 0.0, %v908
        %910 = vmatmul.f32.gmra.mxu0 %v796
        %v911 = vpop.f32.mrf.mxu0
        %v912 = vadd.f32 0.0, %v911
        %913 = vmatmul.f32.gmra.mxu0 %v799
        %v914 = vpop.f32.mrf.mxu0
        %v915 = vadd.f32 0.0, %v914
        %916 = vmatmul.f32.gmra.mxu0 %v802
        %v917 = vpop.f32.mrf.mxu0
        %v918 = vadd.f32 0.0, %v917
        %919 = vmatmul.f32.gmra.mxu0 %v805
        %v920 = vpop.f32.mrf.mxu0
        %v921 = vadd.f32 0.0, %v920
        %922 = vmatmul.f32.gmra.mxu0 %v808
        %v923 = vpop.f32.mrf.mxu0
        %v924 = vadd.f32 0.0, %v923
        %925 = vmatmul.f32.gmra.mxu0 %v811
        %v926 = vpop.f32.mrf.mxu0
        %v927 = vadd.f32 0.0, %v926
        %928 = vmatmul.f32.gmra.mxu0 %v814
        %v929 = vpop.f32.mrf.mxu0
        %v930 = vadd.f32 0.0, %v929
        %931 = vmatmul.f32.gmra.mxu0 %v817
        %v932 = vpop.f32.mrf.mxu0
        %v933 = vadd.f32 0.0, %v932
        %934 = vdwg.mxu0
        %v935 = vadd.f32 %v594, %v840
        %v936 = vadd.f32 %v597, %v843
        %v937 = vadd.f32 %v600, %v846
        %v938 = vadd.f32 %v603, %v849
        %v939 = vadd.f32 %v606, %v852
        %v940 = vadd.f32 %v609, %v855
        %v941 = vadd.f32 %v612, %v858
        %v942 = vadd.f32 %v615, %v861
        %v943 = vadd.f32 %v618, %v864
        %v944 = vadd.f32 %v621, %v867
        %v945 = vadd.f32 %v624, %v870
        %v946 = vadd.f32 %v627, %v873
        %v947 = vadd.f32 %v630, %v876
        %v948 = vadd.f32 %v633, %v879
        %v949 = vadd.f32 %v636, %v882
        %v950 = vadd.f32 %v639, %v885
        %v951 = vadd.f32 %v642, %v888
        %v952 = vadd.f32 %v645, %v891
        %v953 = vadd.f32 %v648, %v894
        %v954 = vadd.f32 %v651, %v897
        %v955 = vadd.f32 %v654, %v900
        %v956 = vadd.f32 %v657, %v903
        %v957 = vadd.f32 %v660, %v906
        %v958 = vadd.f32 %v663, %v909
        %v959 = vadd.f32 %v666, %v912
        %v960 = vadd.f32 %v669, %v915
        %v961 = vadd.f32 %v672, %v918
        %v962 = vadd.f32 %v675, %v921
        %v963 = vadd.f32 %v678, %v924
        %v964 = vadd.f32 %v681, %v927
        %v965 = vadd.f32 %v684, %v930
        %v966 = vadd.f32 %v687, %v933
        %s967 = scalar_lea.vmem %s195, 24
        %v968 = vld [vmem:[%s967] sm:$0xff]
        %v969 = vld [vmem:[%s967 + $0x8] sm:$0xff]
        %v970 = vld [vmem:[%s967 + $0x18] sm:$0xff]
        %v971 = vld [vmem:[%s967 + $0x20] sm:$0xff]
        %v972 = vld [vmem:[%s967 + $0x30] sm:$0xff]
        %v973 = vld [vmem:[%s967 + $0x38] sm:$0xff]
        %v974 = vld [vmem:[%s967 + $0x48] sm:$0xff]
        %v975 = vld [vmem:[%s967 + $0x50] sm:$0xff]
        %v976 = vld [vmem:[%s967 + $0x60] sm:$0xff]
        %v977 = vld [vmem:[%s967 + $0x68] sm:$0xff]
        %v978 = vld [vmem:[%s967 + $0x78] sm:$0xff]
        %v979 = vld [vmem:[%s967 + $0x80] sm:$0xff]
        %v980 = vld [vmem:[%s967 + $0x90] sm:$0xff]
        %v981 = vld [vmem:[%s967 + $0x98] sm:$0xff]
        %v982 = vld [vmem:[%s967 + $0xa8] sm:$0xff]
        %v983 = vld [vmem:[%s967 + $0xb0] sm:$0xff]
        %v984 = vld [vmem:[%s967 + $0xc0] sm:$0xff]
        %v985 = vld [vmem:[%s967 + $0xc8] sm:$0xff]
        %v986 = vld [vmem:[%s967 + $0xd8] sm:$0xff]
        %v987 = vld [vmem:[%s967 + $0xe0] sm:$0xff]
        %v988 = vld [vmem:[%s967 + $0xf0] sm:$0xff]
        %v989 = vld [vmem:[%s967 + $0xf8] sm:$0xff]
        %v990 = vld [vmem:[%s967 + $0x108] sm:$0xff]
        %v991 = vld [vmem:[%s967 + $0x110] sm:$0xff]
        %v992 = vld [vmem:[%s967 + $0x120] sm:$0xff]
        %v993 = vld [vmem:[%s967 + $0x128] sm:$0xff]
        %v994 = vld [vmem:[%s967 + $0x138] sm:$0xff]
        %v995 = vld [vmem:[%s967 + $0x140] sm:$0xff]
        %v996 = vld [vmem:[%s967 + $0x150] sm:$0xff]
        %v997 = vld [vmem:[%s967 + $0x158] sm:$0xff]
        %v998 = vld [vmem:[%s967 + $0x168] sm:$0xff]
        %v999 = vld [vmem:[%s967 + $0x170] sm:$0xff]
        %s1000 = scalar_lea.vmem %s1, 12
        %v1001 = vld [vmem:[%s1000] sm:$0x7]
        %v1003 = vsel %vm263, %v968, 0
        %v1006 = vsel %vm263, %v969, 0
        %v1009 = vsel %vm263, %v970, 0
        %v1012 = vsel %vm263, %v971, 0
        %v1015 = vsel %vm263, %v972, 0
        %v1018 = vsel %vm263, %v973, 0
        %v1021 = vsel %vm263, %v974, 0
        %v1024 = vsel %vm263, %v975, 0
        %v1027 = vsel %vm263, %v976, 0
        %v1030 = vsel %vm263, %v977, 0
        %v1033 = vsel %vm263, %v978, 0
        %v1036 = vsel %vm263, %v979, 0
        %v1039 = vsel %vm263, %v980, 0
        %v1042 = vsel %vm263, %v981, 0
        %v1045 = vsel %vm263, %v982, 0
        %v1048 = vsel %vm263, %v983, 0
        %v1051 = vsel %vm263, %v984, 0
        %v1054 = vsel %vm263, %v985, 0
        %v1057 = vsel %vm263, %v986, 0
        %v1060 = vsel %vm263, %v987, 0
        %v1063 = vsel %vm263, %v988, 0
        %v1066 = vsel %vm263, %v989, 0
        %v1069 = vsel %vm263, %v990, 0
        %v1072 = vsel %vm263, %v991, 0
        %v1075 = vsel %vm263, %v992, 0
        %v1078 = vsel %vm263, %v993, 0
        %v1081 = vsel %vm263, %v994, 0
        %v1084 = vsel %vm263, %v995, 0
        %v1087 = vsel %vm263, %v996, 0
        %v1090 = vsel %vm263, %v997, 0
        %v1093 = vsel %vm263, %v998, 0
        %v1096 = vsel %vm263, %v999, 0
        %v1099 = vsel %vm360, %v1001, 0
        %1101 = vmatpush.msra.mxu0 0.0
        %1102 = vmatpush.msra.mxu0 0.0
        %1103 = vmatpush.msra.mxu0 0.0
        %1104 = vmatpush.msra.mxu0 0.0
        %1105 = vmatpush.msra.mxu0 0.0
        %1106 = vmatpush.msra.mxu0 0.0
        %1107 = vmatpush.msra.mxu0 0.0
        %1108 = vmatpush.msra.mxu0 0.0
        %1109 = vmatpush.msra.mxu0 0.0
        %1110 = vmatpush.msra.mxu0 0.0
        %1111 = vmatpush.msra.mxu0 0.0
        %1112 = vmatpush.msra.mxu0 0.0
        %1113 = vmatpush.msra.mxu0 0.0
        %1114 = vmatpush.msra.mxu0 0.0
        %1115 = vmatpush.msra.mxu0 0.0
        %1116 = vmatpush.msra.mxu0 %v1099
        %1117 = vmatmul.f32.gmra.mxu0 %v1003
        %v1118 = vpop.f32.mrf.mxu0
        %v1119 = vadd.f32 0.0, %v1118
        %1120 = vmatmul.f32.gmra.mxu0 %v1006
        %v1121 = vpop.f32.mrf.mxu0
        %v1122 = vadd.f32 0.0, %v1121
        %1123 = vmatmul.f32.gmra.mxu0 %v1009
        %v1124 = vpop.f32.mrf.mxu0
        %v1125 = vadd.f32 0.0, %v1124
        %1126 = vmatmul.f32.gmra.mxu0 %v1012
        %v1127 = vpop.f32.mrf.mxu0
        %v1128 = vadd.f32 0.0, %v1127
        %1129 = vmatmul.f32.gmra.mxu0 %v1015
        %v1130 = vpop.f32.mrf.mxu0
        %v1131 = vadd.f32 0.0, %v1130
        %1132 = vmatmul.f32.gmra.mxu0 %v1018
        %v1133 = vpop.f32.mrf.mxu0
        %v1134 = vadd.f32 0.0, %v1133
        %1135 = vmatmul.f32.gmra.mxu0 %v1021
        %v1136 = vpop.f32.mrf.mxu0
        %v1137 = vadd.f32 0.0, %v1136
        %1138 = vmatmul.f32.gmra.mxu0 %v1024
        %v1139 = vpop.f32.mrf.mxu0
        %v1140 = vadd.f32 0.0, %v1139
        %1141 = vmatmul.f32.gmra.mxu0 %v1027
        %v1142 = vpop.f32.mrf.mxu0
        %v1143 = vadd.f32 0.0, %v1142
        %1144 = vmatmul.f32.gmra.mxu0 %v1030
        %v1145 = vpop.f32.mrf.mxu0
        %v1146 = vadd.f32 0.0, %v1145
        %1147 = vmatmul.f32.gmra.mxu0 %v1033
        %v1148 = vpop.f32.mrf.mxu0
        %v1149 = vadd.f32 0.0, %v1148
        %1150 = vmatmul.f32.gmra.mxu0 %v1036
        %v1151 = vpop.f32.mrf.mxu0
        %v1152 = vadd.f32 0.0, %v1151
        %1153 = vmatmul.f32.gmra.mxu0 %v1039
        %v1154 = vpop.f32.mrf.mxu0
        %v1155 = vadd.f32 0.0, %v1154
        %1156 = vmatmul.f32.gmra.mxu0 %v1042
        %v1157 = vpop.f32.mrf.mxu0
        %v1158 = vadd.f32 0.0, %v1157
        %1159 = vmatmul.f32.gmra.mxu0 %v1045
        %v1160 = vpop.f32.mrf.mxu0
        %v1161 = vadd.f32 0.0, %v1160
        %1162 = vmatmul.f32.gmra.mxu0 %v1048
        %v1163 = vpop.f32.mrf.mxu0
        %v1164 = vadd.f32 0.0, %v1163
        %1165 = vmatmul.f32.gmra.mxu0 %v1051
        %v1166 = vpop.f32.mrf.mxu0
        %v1167 = vadd.f32 0.0, %v1166
        %1168 = vmatmul.f32.gmra.mxu0 %v1054
        %v1169 = vpop.f32.mrf.mxu0
        %v1170 = vadd.f32 0.0, %v1169
        %1171 = vmatmul.f32.gmra.mxu0 %v1057
        %v1172 = vpop.f32.mrf.mxu0
        %v1173 = vadd.f32 0.0, %v1172
        %1174 = vmatmul.f32.gmra.mxu0 %v1060
        %v1175 = vpop.f32.mrf.mxu0
        %v1176 = vadd.f32 0.0, %v1175
        %1177 = vmatmul.f32.gmra.mxu0 %v1063
        %v1178 = vpop.f32.mrf.mxu0
        %v1179 = vadd.f32 0.0, %v1178
        %1180 = vmatmul.f32.gmra.mxu0 %v1066
        %v1181 = vpop.f32.mrf.mxu0
        %v1182 = vadd.f32 0.0, %v1181
        %1183 = vmatmul.f32.gmra.mxu0 %v1069
        %v1184 = vpop.f32.mrf.mxu0
        %v1185 = vadd.f32 0.0, %v1184
        %1186 = vmatmul.f32.gmra.mxu0 %v1072
        %v1187 = vpop.f32.mrf.mxu0
        %v1188 = vadd.f32 0.0, %v1187
        %1189 = vmatmul.f32.gmra.mxu0 %v1075
        %v1190 = vpop.f32.mrf.mxu0
        %v1191 = vadd.f32 0.0, %v1190
        %1192 = vmatmul.f32.gmra.mxu0 %v1078
        %v1193 = vpop.f32.mrf.mxu0
        %v1194 = vadd.f32 0.0, %v1193
        %1195 = vmatmul.f32.gmra.mxu0 %v1081
        %v1196 = vpop.f32.mrf.mxu0
        %v1197 = vadd.f32 0.0, %v1196
        %1198 = vmatmul.f32.gmra.mxu0 %v1084
        %v1199 = vpop.f32.mrf.mxu0
        %v1200 = vadd.f32 0.0, %v1199
        %1201 = vmatmul.f32.gmra.mxu0 %v1087
        %v1202 = vpop.f32.mrf.mxu0
        %v1203 = vadd.f32 0.0, %v1202
        %1204 = vmatmul.f32.gmra.mxu0 %v1090
        %v1205 = vpop.f32.mrf.mxu0
        %v1206 = vadd.f32 0.0, %v1205
        %1207 = vmatmul.f32.gmra.mxu0 %v1093
        %v1208 = vpop.f32.mrf.mxu0
        %v1209 = vadd.f32 0.0, %v1208
        %1210 = vmatmul.f32.gmra.mxu0 %v1096
        %v1211 = vpop.f32.mrf.mxu0
        %v1212 = vadd.f32 0.0, %v1211
        %1213 = vdwg.mxu0
        %v1214 = vadd.f32 %v935, %v1119
        %v1215 = vadd.f32 %v936, %v1122
        %v1216 = vadd.f32 %v937, %v1125
        %v1217 = vadd.f32 %v938, %v1128
        %v1218 = vadd.f32 %v939, %v1131
        %v1219 = vadd.f32 %v940, %v1134
        %v1220 = vadd.f32 %v941, %v1137
        %v1221 = vadd.f32 %v942, %v1140
        %v1222 = vadd.f32 %v943, %v1143
        %v1223 = vadd.f32 %v944, %v1146
        %v1224 = vadd.f32 %v945, %v1149
        %v1225 = vadd.f32 %v946, %v1152
        %v1226 = vadd.f32 %v947, %v1155
        %v1227 = vadd.f32 %v948, %v1158
        %v1228 = vadd.f32 %v949, %v1161
        %v1229 = vadd.f32 %v950, %v1164
        %v1230 = vadd.f32 %v951, %v1167
        %v1231 = vadd.f32 %v952, %v1170
        %v1232 = vadd.f32 %v953, %v1173
        %v1233 = vadd.f32 %v954, %v1176
        %v1234 = vadd.f32 %v955, %v1179
        %v1235 = vadd.f32 %v956, %v1182
        %v1236 = vadd.f32 %v957, %v1185
        %v1237 = vadd.f32 %v958, %v1188
        %v1238 = vadd.f32 %v959, %v1191
        %v1239 = vadd.f32 %v960, %v1194
        %v1240 = vadd.f32 %v961, %v1197
        %v1241 = vadd.f32 %v962, %v1200
        %v1242 = vadd.f32 %v963, %v1203
        %v1243 = vadd.f32 %v964, %v1206
        %v1244 = vadd.f32 %v965, %v1209
        %v1245 = vadd.f32 %v966, %v1212
        %v1246 = vld [vmem:[%s967 + $0x1] sm:$0xff]
        %v1247 = vld [vmem:[%s967 + $0x9] sm:$0xff]
        %v1248 = vld [vmem:[%s967 + $0x19] sm:$0xff]
        %v1249 = vld [vmem:[%s967 + $0x21] sm:$0xff]
        %v1250 = vld [vmem:[%s967 + $0x31] sm:$0xff]
        %v1251 = vld [vmem:[%s967 + $0x39] sm:$0xff]
        %v1252 = vld [vmem:[%s967 + $0x49] sm:$0xff]
        %v1253 = vld [vmem:[%s967 + $0x51] sm:$0xff]
        %v1254 = vld [vmem:[%s967 + $0x61] sm:$0xff]
        %v1255 = vld [vmem:[%s967 + $0x69] sm:$0xff]
        %v1256 = vld [vmem:[%s967 + $0x79] sm:$0xff]
        %v1257 = vld [vmem:[%s967 + $0x81] sm:$0xff]
        %v1258 = vld [vmem:[%s967 + $0x91] sm:$0xff]
        %v1259 = vld [vmem:[%s967 + $0x99] sm:$0xff]
        %v1260 = vld [vmem:[%s967 + $0xa9] sm:$0xff]
        %v1261 = vld [vmem:[%s967 + $0xb1] sm:$0xff]
        %v1262 = vld [vmem:[%s967 + $0xc1] sm:$0xff]
        %v1263 = vld [vmem:[%s967 + $0xc9] sm:$0xff]
        %v1264 = vld [vmem:[%s967 + $0xd9] sm:$0xff]
        %v1265 = vld [vmem:[%s967 + $0xe1] sm:$0xff]
        %v1266 = vld [vmem:[%s967 + $0xf1] sm:$0xff]
        %v1267 = vld [vmem:[%s967 + $0xf9] sm:$0xff]
        %v1268 = vld [vmem:[%s967 + $0x109] sm:$0xff]
        %v1269 = vld [vmem:[%s967 + $0x111] sm:$0xff]
        %v1270 = vld [vmem:[%s967 + $0x121] sm:$0xff]
        %v1271 = vld [vmem:[%s967 + $0x129] sm:$0xff]
        %v1272 = vld [vmem:[%s967 + $0x139] sm:$0xff]
        %v1273 = vld [vmem:[%s967 + $0x141] sm:$0xff]
        %v1274 = vld [vmem:[%s967 + $0x151] sm:$0xff]
        %v1275 = vld [vmem:[%s967 + $0x159] sm:$0xff]
        %v1276 = vld [vmem:[%s967 + $0x169] sm:$0xff]
        %v1277 = vld [vmem:[%s967 + $0x171] sm:$0xff]
        %s1278 = scalar_lea.vmem %s1, 16
        %v1279 = vld [vmem:[%s1278] sm:$0x7]
        %v1281 = vsel %vm263, %v1246, 0
        %v1284 = vsel %vm263, %v1247, 0
        %v1287 = vsel %vm263, %v1248, 0
        %v1290 = vsel %vm263, %v1249, 0
        %v1293 = vsel %vm263, %v1250, 0
        %v1296 = vsel %vm263, %v1251, 0
        %v1299 = vsel %vm263, %v1252, 0
        %v1302 = vsel %vm263, %v1253, 0
        %v1305 = vsel %vm263, %v1254, 0
        %v1308 = vsel %vm263, %v1255, 0
        %v1311 = vsel %vm263, %v1256, 0
        %v1314 = vsel %vm263, %v1257, 0
        %v1317 = vsel %vm263, %v1258, 0
        %v1320 = vsel %vm263, %v1259, 0
        %v1323 = vsel %vm263, %v1260, 0
        %v1326 = vsel %vm263, %v1261, 0
        %v1329 = vsel %vm263, %v1262, 0
        %v1332 = vsel %vm263, %v1263, 0
        %v1335 = vsel %vm263, %v1264, 0
        %v1338 = vsel %vm263, %v1265, 0
        %v1341 = vsel %vm263, %v1266, 0
        %v1344 = vsel %vm263, %v1267, 0
        %v1347 = vsel %vm263, %v1268, 0
        %v1350 = vsel %vm263, %v1269, 0
        %v1353 = vsel %vm263, %v1270, 0
        %v1356 = vsel %vm263, %v1271, 0
        %v1359 = vsel %vm263, %v1272, 0
        %v1362 = vsel %vm263, %v1273, 0
        %v1365 = vsel %vm263, %v1274, 0
        %v1368 = vsel %vm263, %v1275, 0
        %v1371 = vsel %vm263, %v1276, 0
        %v1374 = vsel %vm263, %v1277, 0
        %v1377 = vsel %vm360, %v1279, 0
        %1379 = vmatpush.msra.mxu0 0.0
        %1380 = vmatpush.msra.mxu0 0.0
        %1381 = vmatpush.msra.mxu0 0.0
        %1382 = vmatpush.msra.mxu0 0.0
        %1383 = vmatpush.msra.mxu0 0.0
        %1384 = vmatpush.msra.mxu0 0.0
        %1385 = vmatpush.msra.mxu0 0.0
        %1386 = vmatpush.msra.mxu0 0.0
        %1387 = vmatpush.msra.mxu0 0.0
        %1388 = vmatpush.msra.mxu0 0.0
        %1389 = vmatpush.msra.mxu0 0.0
        %1390 = vmatpush.msra.mxu0 0.0
        %1391 = vmatpush.msra.mxu0 0.0
        %1392 = vmatpush.msra.mxu0 0.0
        %1393 = vmatpush.msra.mxu0 0.0
        %1394 = vmatpush.msra.mxu0 %v1377
        %1395 = vmatmul.f32.gmra.mxu0 %v1281
        %v1396 = vpop.f32.mrf.mxu0
        %v1397 = vadd.f32 0.0, %v1396
        %1398 = vmatmul.f32.gmra.mxu0 %v1284
        %v1399 = vpop.f32.mrf.mxu0
        %v1400 = vadd.f32 0.0, %v1399
        %1401 = vmatmul.f32.gmra.mxu0 %v1287
        %v1402 = vpop.f32.mrf.mxu0
        %v1403 = vadd.f32 0.0, %v1402
        %1404 = vmatmul.f32.gmra.mxu0 %v1290
        %v1405 = vpop.f32.mrf.mxu0
        %v1406 = vadd.f32 0.0, %v1405
        %1407 = vmatmul.f32.gmra.mxu0 %v1293
        %v1408 = vpop.f32.mrf.mxu0
        %v1409 = vadd.f32 0.0, %v1408
        %1410 = vmatmul.f32.gmra.mxu0 %v1296
        %v1411 = vpop.f32.mrf.mxu0
        %v1412 = vadd.f32 0.0, %v1411
        %1413 = vmatmul.f32.gmra.mxu0 %v1299
        %v1414 = vpop.f32.mrf.mxu0
        %v1415 = vadd.f32 0.0, %v1414
        %1416 = vmatmul.f32.gmra.mxu0 %v1302
        %v1417 = vpop.f32.mrf.mxu0
        %v1418 = vadd.f32 0.0, %v1417
        %1419 = vmatmul.f32.gmra.mxu0 %v1305
        %v1420 = vpop.f32.mrf.mxu0
        %v1421 = vadd.f32 0.0, %v1420
        %1422 = vmatmul.f32.gmra.mxu0 %v1308
        %v1423 = vpop.f32.mrf.mxu0
        %v1424 = vadd.f32 0.0, %v1423
        %1425 = vmatmul.f32.gmra.mxu0 %v1311
        %v1426 = vpop.f32.mrf.mxu0
        %v1427 = vadd.f32 0.0, %v1426
        %1428 = vmatmul.f32.gmra.mxu0 %v1314
        %v1429 = vpop.f32.mrf.mxu0
        %v1430 = vadd.f32 0.0, %v1429
        %1431 = vmatmul.f32.gmra.mxu0 %v1317
        %v1432 = vpop.f32.mrf.mxu0
        %v1433 = vadd.f32 0.0, %v1432
        %1434 = vmatmul.f32.gmra.mxu0 %v1320
        %v1435 = vpop.f32.mrf.mxu0
        %v1436 = vadd.f32 0.0, %v1435
        %1437 = vmatmul.f32.gmra.mxu0 %v1323
        %v1438 = vpop.f32.mrf.mxu0
        %v1439 = vadd.f32 0.0, %v1438
        %1440 = vmatmul.f32.gmra.mxu0 %v1326
        %v1441 = vpop.f32.mrf.mxu0
        %v1442 = vadd.f32 0.0, %v1441
        %1443 = vmatmul.f32.gmra.mxu0 %v1329
        %v1444 = vpop.f32.mrf.mxu0
        %v1445 = vadd.f32 0.0, %v1444
        %1446 = vmatmul.f32.gmra.mxu0 %v1332
        %v1447 = vpop.f32.mrf.mxu0
        %v1448 = vadd.f32 0.0, %v1447
        %1449 = vmatmul.f32.gmra.mxu0 %v1335
        %v1450 = vpop.f32.mrf.mxu0
        %v1451 = vadd.f32 0.0, %v1450
        %1452 = vmatmul.f32.gmra.mxu0 %v1338
        %v1453 = vpop.f32.mrf.mxu0
        %v1454 = vadd.f32 0.0, %v1453
        %1455 = vmatmul.f32.gmra.mxu0 %v1341
        %v1456 = vpop.f32.mrf.mxu0
        %v1457 = vadd.f32 0.0, %v1456
        %1458 = vmatmul.f32.gmra.mxu0 %v1344
        %v1459 = vpop.f32.mrf.mxu0
        %v1460 = vadd.f32 0.0, %v1459
        %1461 = vmatmul.f32.gmra.mxu0 %v1347
        %v1462 = vpop.f32.mrf.mxu0
        %v1463 = vadd.f32 0.0, %v1462
        %1464 = vmatmul.f32.gmra.mxu0 %v1350
        %v1465 = vpop.f32.mrf.mxu0
        %v1466 = vadd.f32 0.0, %v1465
        %1467 = vmatmul.f32.gmra.mxu0 %v1353
        %v1468 = vpop.f32.mrf.mxu0
        %v1469 = vadd.f32 0.0, %v1468
        %1470 = vmatmul.f32.gmra.mxu0 %v1356
        %v1471 = vpop.f32.mrf.mxu0
        %v1472 = vadd.f32 0.0, %v1471
        %1473 = vmatmul.f32.gmra.mxu0 %v1359
        %v1474 = vpop.f32.mrf.mxu0
        %v1475 = vadd.f32 0.0, %v1474
        %1476 = vmatmul.f32.gmra.mxu0 %v1362
        %v1477 = vpop.f32.mrf.mxu0
        %v1478 = vadd.f32 0.0, %v1477
        %1479 = vmatmul.f32.gmra.mxu0 %v1365
        %v1480 = vpop.f32.mrf.mxu0
        %v1481 = vadd.f32 0.0, %v1480
        %1482 = vmatmul.f32.gmra.mxu0 %v1368
        %v1483 = vpop.f32.mrf.mxu0
        %v1484 = vadd.f32 0.0, %v1483
        %1485 = vmatmul.f32.gmra.mxu0 %v1371
        %v1486 = vpop.f32.mrf.mxu0
        %v1487 = vadd.f32 0.0, %v1486
        %1488 = vmatmul.f32.gmra.mxu0 %v1374
        %v1489 = vpop.f32.mrf.mxu0
        %v1490 = vadd.f32 0.0, %v1489
        %1491 = vdwg.mxu0
        %v1492 = vadd.f32 %v1214, %v1397
        %v1493 = vadd.f32 %v1215, %v1400
        %v1494 = vadd.f32 %v1216, %v1403
        %v1495 = vadd.f32 %v1217, %v1406
        %v1496 = vadd.f32 %v1218, %v1409
        %v1497 = vadd.f32 %v1219, %v1412
        %v1498 = vadd.f32 %v1220, %v1415
        %v1499 = vadd.f32 %v1221, %v1418
        %v1500 = vadd.f32 %v1222, %v1421
        %v1501 = vadd.f32 %v1223, %v1424
        %v1502 = vadd.f32 %v1224, %v1427
        %v1503 = vadd.f32 %v1225, %v1430
        %v1504 = vadd.f32 %v1226, %v1433
        %v1505 = vadd.f32 %v1227, %v1436
        %v1506 = vadd.f32 %v1228, %v1439
        %v1507 = vadd.f32 %v1229, %v1442
        %v1508 = vadd.f32 %v1230, %v1445
        %v1509 = vadd.f32 %v1231, %v1448
        %v1510 = vadd.f32 %v1232, %v1451
        %v1511 = vadd.f32 %v1233, %v1454
        %v1512 = vadd.f32 %v1234, %v1457
        %v1513 = vadd.f32 %v1235, %v1460
        %v1514 = vadd.f32 %v1236, %v1463
        %v1515 = vadd.f32 %v1237, %v1466
        %v1516 = vadd.f32 %v1238, %v1469
        %v1517 = vadd.f32 %v1239, %v1472
        %v1518 = vadd.f32 %v1240, %v1475
        %v1519 = vadd.f32 %v1241, %v1478
        %v1520 = vadd.f32 %v1242, %v1481
        %v1521 = vadd.f32 %v1243, %v1484
        %v1522 = vadd.f32 %v1244, %v1487
        %v1523 = vadd.f32 %v1245, %v1490
        %v1524 = vld [vmem:[%s967 + $0x2] sm:$0xff]
        %v1525 = vld [vmem:[%s967 + $0xa] sm:$0xff]
        %v1526 = vld [vmem:[%s967 + $0x1a] sm:$0xff]
        %v1527 = vld [vmem:[%s967 + $0x22] sm:$0xff]
        %v1528 = vld [vmem:[%s967 + $0x32] sm:$0xff]
        %v1529 = vld [vmem:[%s967 + $0x3a] sm:$0xff]
        %v1530 = vld [vmem:[%s967 + $0x4a] sm:$0xff]
        %v1531 = vld [vmem:[%s967 + $0x52] sm:$0xff]
        %v1532 = vld [vmem:[%s967 + $0x62] sm:$0xff]
        %v1533 = vld [vmem:[%s967 + $0x6a] sm:$0xff]
        %v1534 = vld [vmem:[%s967 + $0x7a] sm:$0xff]
        %v1535 = vld [vmem:[%s967 + $0x82] sm:$0xff]
        %v1536 = vld [vmem:[%s967 + $0x92] sm:$0xff]
        %v1537 = vld [vmem:[%s967 + $0x9a] sm:$0xff]
        %v1538 = vld [vmem:[%s967 + $0xaa] sm:$0xff]
        %v1539 = vld [vmem:[%s967 + $0xb2] sm:$0xff]
        %v1540 = vld [vmem:[%s967 + $0xc2] sm:$0xff]
        %v1541 = vld [vmem:[%s967 + $0xca] sm:$0xff]
        %v1542 = vld [vmem:[%s967 + $0xda] sm:$0xff]
        %v1543 = vld [vmem:[%s967 + $0xe2] sm:$0xff]
        %v1544 = vld [vmem:[%s967 + $0xf2] sm:$0xff]
        %v1545 = vld [vmem:[%s967 + $0xfa] sm:$0xff]
        %v1546 = vld [vmem:[%s967 + $0x10a] sm:$0xff]
        %v1547 = vld [vmem:[%s967 + $0x112] sm:$0xff]
        %v1548 = vld [vmem:[%s967 + $0x122] sm:$0xff]
        %v1549 = vld [vmem:[%s967 + $0x12a] sm:$0xff]
        %v1550 = vld [vmem:[%s967 + $0x13a] sm:$0xff]
        %v1551 = vld [vmem:[%s967 + $0x142] sm:$0xff]
        %v1552 = vld [vmem:[%s967 + $0x152] sm:$0xff]
        %v1553 = vld [vmem:[%s967 + $0x15a] sm:$0xff]
        %v1554 = vld [vmem:[%s967 + $0x16a] sm:$0xff]
        %v1555 = vld [vmem:[%s967 + $0x172] sm:$0xff]
        %s1556 = scalar_lea.vmem %s1, 20
        %v1557 = vld [vmem:[%s1556] sm:$0x7]
        %v1559 = vsel %vm263, %v1524, 0
        %v1562 = vsel %vm263, %v1525, 0
        %v1565 = vsel %vm263, %v1526, 0
        %v1568 = vsel %vm263, %v1527, 0
        %v1571 = vsel %vm263, %v1528, 0
        %v1574 = vsel %vm263, %v1529, 0
        %v1577 = vsel %vm263, %v1530, 0
        %v1580 = vsel %vm263, %v1531, 0
        %v1583 = vsel %vm263, %v1532, 0
        %v1586 = vsel %vm263, %v1533, 0
        %v1589 = vsel %vm263, %v1534, 0
        %v1592 = vsel %vm263, %v1535, 0
        %v1595 = vsel %vm263, %v1536, 0
        %v1598 = vsel %vm263, %v1537, 0
        %v1601 = vsel %vm263, %v1538, 0
        %v1604 = vsel %vm263, %v1539, 0
        %v1607 = vsel %vm263, %v1540, 0
        %v1610 = vsel %vm263, %v1541, 0
        %v1613 = vsel %vm263, %v1542, 0
        %v1616 = vsel %vm263, %v1543, 0
        %v1619 = vsel %vm263, %v1544, 0
        %v1622 = vsel %vm263, %v1545, 0
        %v1625 = vsel %vm263, %v1546, 0
        %v1628 = vsel %vm263, %v1547, 0
        %v1631 = vsel %vm263, %v1548, 0
        %v1634 = vsel %vm263, %v1549, 0
        %v1637 = vsel %vm263, %v1550, 0
        %v1640 = vsel %vm263, %v1551, 0
        %v1643 = vsel %vm263, %v1552, 0
        %v1646 = vsel %vm263, %v1553, 0
        %v1649 = vsel %vm263, %v1554, 0
        %v1652 = vsel %vm263, %v1555, 0
        %v1655 = vsel %vm360, %v1557, 0
        %1657 = vmatpush.msra.mxu0 0.0
        %1658 = vmatpush.msra.mxu0 0.0
        %1659 = vmatpush.msra.mxu0 0.0
        %1660 = vmatpush.msra.mxu0 0.0
        %1661 = vmatpush.msra.mxu0 0.0
        %1662 = vmatpush.msra.mxu0 0.0
        %1663 = vmatpush.msra.mxu0 0.0
        %1664 = vmatpush.msra.mxu0 0.0
        %1665 = vmatpush.msra.mxu0 0.0
        %1666 = vmatpush.msra.mxu0 0.0
        %1667 = vmatpush.msra.mxu0 0.0
        %1668 = vmatpush.msra.mxu0 0.0
        %1669 = vmatpush.msra.mxu0 0.0
        %1670 = vmatpush.msra.mxu0 0.0
        %1671 = vmatpush.msra.mxu0 0.0
        %1672 = vmatpush.msra.mxu0 %v1655
        %1673 = vmatmul.f32.gmra.mxu0 %v1559
        %v1674 = vpop.f32.mrf.mxu0
        %v1675 = vadd.f32 0.0, %v1674
        %1676 = vmatmul.f32.gmra.mxu0 %v1562
        %v1677 = vpop.f32.mrf.mxu0
        %v1678 = vadd.f32 0.0, %v1677
        %1679 = vmatmul.f32.gmra.mxu0 %v1565
        %v1680 = vpop.f32.mrf.mxu0
        %v1681 = vadd.f32 0.0, %v1680
        %1682 = vmatmul.f32.gmra.mxu0 %v1568
        %v1683 = vpop.f32.mrf.mxu0
        %v1684 = vadd.f32 0.0, %v1683
        %1685 = vmatmul.f32.gmra.mxu0 %v1571
        %v1686 = vpop.f32.mrf.mxu0
        %v1687 = vadd.f32 0.0, %v1686
        %1688 = vmatmul.f32.gmra.mxu0 %v1574
        %v1689 = vpop.f32.mrf.mxu0
        %v1690 = vadd.f32 0.0, %v1689
        %1691 = vmatmul.f32.gmra.mxu0 %v1577
        %v1692 = vpop.f32.mrf.mxu0
        %v1693 = vadd.f32 0.0, %v1692
        %1694 = vmatmul.f32.gmra.mxu0 %v1580
        %v1695 = vpop.f32.mrf.mxu0
        %v1696 = vadd.f32 0.0, %v1695
        %1697 = vmatmul.f32.gmra.mxu0 %v1583
        %v1698 = vpop.f32.mrf.mxu0
        %v1699 = vadd.f32 0.0, %v1698
        %1700 = vmatmul.f32.gmra.mxu0 %v1586
        %v1701 = vpop.f32.mrf.mxu0
        %v1702 = vadd.f32 0.0, %v1701
        %1703 = vmatmul.f32.gmra.mxu0 %v1589
        %v1704 = vpop.f32.mrf.mxu0
        %v1705 = vadd.f32 0.0, %v1704
        %1706 = vmatmul.f32.gmra.mxu0 %v1592
        %v1707 = vpop.f32.mrf.mxu0
        %v1708 = vadd.f32 0.0, %v1707
        %1709 = vmatmul.f32.gmra.mxu0 %v1595
        %v1710 = vpop.f32.mrf.mxu0
        %v1711 = vadd.f32 0.0, %v1710
        %1712 = vmatmul.f32.gmra.mxu0 %v1598
        %v1713 = vpop.f32.mrf.mxu0
        %v1714 = vadd.f32 0.0, %v1713
        %1715 = vmatmul.f32.gmra.mxu0 %v1601
        %v1716 = vpop.f32.mrf.mxu0
        %v1717 = vadd.f32 0.0, %v1716
        %1718 = vmatmul.f32.gmra.mxu0 %v1604
        %v1719 = vpop.f32.mrf.mxu0
        %v1720 = vadd.f32 0.0, %v1719
        %1721 = vmatmul.f32.gmra.mxu0 %v1607
        %v1722 = vpop.f32.mrf.mxu0
        %v1723 = vadd.f32 0.0, %v1722
        %1724 = vmatmul.f32.gmra.mxu0 %v1610
        %v1725 = vpop.f32.mrf.mxu0
        %v1726 = vadd.f32 0.0, %v1725
        %1727 = vmatmul.f32.gmra.mxu0 %v1613
        %v1728 = vpop.f32.mrf.mxu0
        %v1729 = vadd.f32 0.0, %v1728
        %1730 = vmatmul.f32.gmra.mxu0 %v1616
        %v1731 = vpop.f32.mrf.mxu0
        %v1732 = vadd.f32 0.0, %v1731
        %1733 = vmatmul.f32.gmra.mxu0 %v1619
        %v1734 = vpop.f32.mrf.mxu0
        %v1735 = vadd.f32 0.0, %v1734
        %1736 = vmatmul.f32.gmra.mxu0 %v1622
        %v1737 = vpop.f32.mrf.mxu0
        %v1738 = vadd.f32 0.0, %v1737
        %1739 = vmatmul.f32.gmra.mxu0 %v1625
        %v1740 = vpop.f32.mrf.mxu0
        %v1741 = vadd.f32 0.0, %v1740
        %1742 = vmatmul.f32.gmra.mxu0 %v1628
        %v1743 = vpop.f32.mrf.mxu0
        %v1744 = vadd.f32 0.0, %v1743
        %1745 = vmatmul.f32.gmra.mxu0 %v1631
        %v1746 = vpop.f32.mrf.mxu0
        %v1747 = vadd.f32 0.0, %v1746
        %1748 = vmatmul.f32.gmra.mxu0 %v1634
        %v1749 = vpop.f32.mrf.mxu0
        %v1750 = vadd.f32 0.0, %v1749
        %1751 = vmatmul.f32.gmra.mxu0 %v1637
        %v1752 = vpop.f32.mrf.mxu0
        %v1753 = vadd.f32 0.0, %v1752
        %1754 = vmatmul.f32.gmra.mxu0 %v1640
        %v1755 = vpop.f32.mrf.mxu0
        %v1756 = vadd.f32 0.0, %v1755
        %1757 = vmatmul.f32.gmra.mxu0 %v1643
        %v1758 = vpop.f32.mrf.mxu0
        %v1759 = vadd.f32 0.0, %v1758
        %1760 = vmatmul.f32.gmra.mxu0 %v1646
        %v1761 = vpop.f32.mrf.mxu0
        %v1762 = vadd.f32 0.0, %v1761
        %1763 = vmatmul.f32.gmra.mxu0 %v1649
        %v1764 = vpop.f32.mrf.mxu0
        %v1765 = vadd.f32 0.0, %v1764
        %1766 = vmatmul.f32.gmra.mxu0 %v1652
        %v1767 = vpop.f32.mrf.mxu0
        %v1768 = vadd.f32 0.0, %v1767
        %1769 = vdwg.mxu0
        %v1770 = vadd.f32 %v1492, %v1675
        %v1771 = vadd.f32 %v1493, %v1678
        %v1772 = vadd.f32 %v1494, %v1681
        %v1773 = vadd.f32 %v1495, %v1684
        %v1774 = vadd.f32 %v1496, %v1687
        %v1775 = vadd.f32 %v1497, %v1690
        %v1776 = vadd.f32 %v1498, %v1693
        %v1777 = vadd.f32 %v1499, %v1696
        %v1778 = vadd.f32 %v1500, %v1699
        %v1779 = vadd.f32 %v1501, %v1702
        %v1780 = vadd.f32 %v1502, %v1705
        %v1781 = vadd.f32 %v1503, %v1708
        %v1782 = vadd.f32 %v1504, %v1711
        %v1783 = vadd.f32 %v1505, %v1714
        %v1784 = vadd.f32 %v1506, %v1717
        %v1785 = vadd.f32 %v1507, %v1720
        %v1786 = vadd.f32 %v1508, %v1723
        %v1787 = vadd.f32 %v1509, %v1726
        %v1788 = vadd.f32 %v1510, %v1729
        %v1789 = vadd.f32 %v1511, %v1732
        %v1790 = vadd.f32 %v1512, %v1735
        %v1791 = vadd.f32 %v1513, %v1738
        %v1792 = vadd.f32 %v1514, %v1741
        %v1793 = vadd.f32 %v1515, %v1744
        %v1794 = vadd.f32 %v1516, %v1747
        %v1795 = vadd.f32 %v1517, %v1750
        %v1796 = vadd.f32 %v1518, %v1753
        %v1797 = vadd.f32 %v1519, %v1756
        %v1798 = vadd.f32 %v1520, %v1759
        %v1799 = vadd.f32 %v1521, %v1762
        %v1800 = vadd.f32 %v1522, %v1765
        %v1801 = vadd.f32 %v1523, %v1768
        %s1802 = scalar_lea.vmem %s195, 48
        %v1803 = vld [vmem:[%s1802] sm:$0xff]
        %v1804 = vld [vmem:[%s1802 + $0x8] sm:$0xff]
        %v1805 = vld [vmem:[%s1802 + $0x18] sm:$0xff]
        %v1806 = vld [vmem:[%s1802 + $0x20] sm:$0xff]
        %v1807 = vld [vmem:[%s1802 + $0x30] sm:$0xff]
        %v1808 = vld [vmem:[%s1802 + $0x38] sm:$0xff]
        %v1809 = vld [vmem:[%s1802 + $0x48] sm:$0xff]
        %v1810 = vld [vmem:[%s1802 + $0x50] sm:$0xff]
        %v1811 = vld [vmem:[%s1802 + $0x60] sm:$0xff]
        %v1812 = vld [vmem:[%s1802 + $0x68] sm:$0xff]
        %v1813 = vld [vmem:[%s1802 + $0x78] sm:$0xff]
        %v1814 = vld [vmem:[%s1802 + $0x80] sm:$0xff]
        %v1815 = vld [vmem:[%s1802 + $0x90] sm:$0xff]
        %v1816 = vld [vmem:[%s1802 + $0x98] sm:$0xff]
        %v1817 = vld [vmem:[%s1802 + $0xa8] sm:$0xff]
        %v1818 = vld [vmem:[%s1802 + $0xb0] sm:$0xff]
        %v1819 = vld [vmem:[%s1802 + $0xc0] sm:$0xff]
        %v1820 = vld [vmem:[%s1802 + $0xc8] sm:$0xff]
        %v1821 = vld [vmem:[%s1802 + $0xd8] sm:$0xff]
        %v1822 = vld [vmem:[%s1802 + $0xe0] sm:$0xff]
        %v1823 = vld [vmem:[%s1802 + $0xf0] sm:$0xff]
        %v1824 = vld [vmem:[%s1802 + $0xf8] sm:$0xff]
        %v1825 = vld [vmem:[%s1802 + $0x108] sm:$0xff]
        %v1826 = vld [vmem:[%s1802 + $0x110] sm:$0xff]
        %v1827 = vld [vmem:[%s1802 + $0x120] sm:$0xff]
        %v1828 = vld [vmem:[%s1802 + $0x128] sm:$0xff]
        %v1829 = vld [vmem:[%s1802 + $0x138] sm:$0xff]
        %v1830 = vld [vmem:[%s1802 + $0x140] sm:$0xff]
        %v1831 = vld [vmem:[%s1802 + $0x150] sm:$0xff]
        %v1832 = vld [vmem:[%s1802 + $0x158] sm:$0xff]
        %v1833 = vld [vmem:[%s1802 + $0x168] sm:$0xff]
        %v1834 = vld [vmem:[%s1802 + $0x170] sm:$0xff]
        %s1835 = scalar_lea.vmem %s1, 24
        %v1836 = vld [vmem:[%s1835] sm:$0x7]
        %v1838 = vsel %vm263, %v1803, 0
        %v1841 = vsel %vm263, %v1804, 0
        %v1844 = vsel %vm263, %v1805, 0
        %v1847 = vsel %vm263, %v1806, 0
        %v1850 = vsel %vm263, %v1807, 0
        %v1853 = vsel %vm263, %v1808, 0
        %v1856 = vsel %vm263, %v1809, 0
        %v1859 = vsel %vm263, %v1810, 0
        %v1862 = vsel %vm263, %v1811, 0
        %v1865 = vsel %vm263, %v1812, 0
        %v1868 = vsel %vm263, %v1813, 0
        %v1871 = vsel %vm263, %v1814, 0
        %v1874 = vsel %vm263, %v1815, 0
        %v1877 = vsel %vm263, %v1816, 0
        %v1880 = vsel %vm263, %v1817, 0
        %v1883 = vsel %vm263, %v1818, 0
        %v1886 = vsel %vm263, %v1819, 0
        %v1889 = vsel %vm263, %v1820, 0
        %v1892 = vsel %vm263, %v1821, 0
        %v1895 = vsel %vm263, %v1822, 0
        %v1898 = vsel %vm263, %v1823, 0
        %v1901 = vsel %vm263, %v1824, 0
        %v1904 = vsel %vm263, %v1825, 0
        %v1907 = vsel %vm263, %v1826, 0
        %v1910 = vsel %vm263, %v1827, 0
        %v1913 = vsel %vm263, %v1828, 0
        %v1916 = vsel %vm263, %v1829, 0
        %v1919 = vsel %vm263, %v1830, 0
        %v1922 = vsel %vm263, %v1831, 0
        %v1925 = vsel %vm263, %v1832, 0
        %v1928 = vsel %vm263, %v1833, 0
        %v1931 = vsel %vm263, %v1834, 0
        %v1934 = vsel %vm360, %v1836, 0
        %1936 = vmatpush.msra.mxu0 0.0
        %1937 = vmatpush.msra.mxu0 0.0
        %1938 = vmatpush.msra.mxu0 0.0
        %1939 = vmatpush.msra.mxu0 0.0
        %1940 = vmatpush.msra.mxu0 0.0
        %1941 = vmatpush.msra.mxu0 0.0
        %1942 = vmatpush.msra.mxu0 0.0
        %1943 = vmatpush.msra.mxu0 0.0
        %1944 = vmatpush.msra.mxu0 0.0
        %1945 = vmatpush.msra.mxu0 0.0
        %1946 = vmatpush.msra.mxu0 0.0
        %1947 = vmatpush.msra.mxu0 0.0
        %1948 = vmatpush.msra.mxu0 0.0
        %1949 = vmatpush.msra.mxu0 0.0
        %1950 = vmatpush.msra.mxu0 0.0
        %1951 = vmatpush.msra.mxu0 %v1934
        %1952 = vmatmul.f32.gmra.mxu0 %v1838
        %v1953 = vpop.f32.mrf.mxu0
        %v1954 = vadd.f32 0.0, %v1953
        %1955 = vmatmul.f32.gmra.mxu0 %v1841
        %v1956 = vpop.f32.mrf.mxu0
        %v1957 = vadd.f32 0.0, %v1956
        %1958 = vmatmul.f32.gmra.mxu0 %v1844
        %v1959 = vpop.f32.mrf.mxu0
        %v1960 = vadd.f32 0.0, %v1959
        %1961 = vmatmul.f32.gmra.mxu0 %v1847
        %v1962 = vpop.f32.mrf.mxu0
        %v1963 = vadd.f32 0.0, %v1962
        %1964 = vmatmul.f32.gmra.mxu0 %v1850
        %v1965 = vpop.f32.mrf.mxu0
        %v1966 = vadd.f32 0.0, %v1965
        %1967 = vmatmul.f32.gmra.mxu0 %v1853
        %v1968 = vpop.f32.mrf.mxu0
        %v1969 = vadd.f32 0.0, %v1968
        %1970 = vmatmul.f32.gmra.mxu0 %v1856
        %v1971 = vpop.f32.mrf.mxu0
        %v1972 = vadd.f32 0.0, %v1971
        %1973 = vmatmul.f32.gmra.mxu0 %v1859
        %v1974 = vpop.f32.mrf.mxu0
        %v1975 = vadd.f32 0.0, %v1974
        %1976 = vmatmul.f32.gmra.mxu0 %v1862
        %v1977 = vpop.f32.mrf.mxu0
        %v1978 = vadd.f32 0.0, %v1977
        %1979 = vmatmul.f32.gmra.mxu0 %v1865
        %v1980 = vpop.f32.mrf.mxu0
        %v1981 = vadd.f32 0.0, %v1980
        %1982 = vmatmul.f32.gmra.mxu0 %v1868
        %v1983 = vpop.f32.mrf.mxu0
        %v1984 = vadd.f32 0.0, %v1983
        %1985 = vmatmul.f32.gmra.mxu0 %v1871
        %v1986 = vpop.f32.mrf.mxu0
        %v1987 = vadd.f32 0.0, %v1986
        %1988 = vmatmul.f32.gmra.mxu0 %v1874
        %v1989 = vpop.f32.mrf.mxu0
        %v1990 = vadd.f32 0.0, %v1989
        %1991 = vmatmul.f32.gmra.mxu0 %v1877
        %v1992 = vpop.f32.mrf.mxu0
        %v1993 = vadd.f32 0.0, %v1992
        %1994 = vmatmul.f32.gmra.mxu0 %v1880
        %v1995 = vpop.f32.mrf.mxu0
        %v1996 = vadd.f32 0.0, %v1995
        %1997 = vmatmul.f32.gmra.mxu0 %v1883
        %v1998 = vpop.f32.mrf.mxu0
        %v1999 = vadd.f32 0.0, %v1998
        %2000 = vmatmul.f32.gmra.mxu0 %v1886
        %v2001 = vpop.f32.mrf.mxu0
        %v2002 = vadd.f32 0.0, %v2001
        %2003 = vmatmul.f32.gmra.mxu0 %v1889
        %v2004 = vpop.f32.mrf.mxu0
        %v2005 = vadd.f32 0.0, %v2004
        %2006 = vmatmul.f32.gmra.mxu0 %v1892
        %v2007 = vpop.f32.mrf.mxu0
        %v2008 = vadd.f32 0.0, %v2007
        %2009 = vmatmul.f32.gmra.mxu0 %v1895
        %v2010 = vpop.f32.mrf.mxu0
        %v2011 = vadd.f32 0.0, %v2010
        %2012 = vmatmul.f32.gmra.mxu0 %v1898
        %v2013 = vpop.f32.mrf.mxu0
        %v2014 = vadd.f32 0.0, %v2013
        %2015 = vmatmul.f32.gmra.mxu0 %v1901
        %v2016 = vpop.f32.mrf.mxu0
        %v2017 = vadd.f32 0.0, %v2016
        %2018 = vmatmul.f32.gmra.mxu0 %v1904
        %v2019 = vpop.f32.mrf.mxu0
        %v2020 = vadd.f32 0.0, %v2019
        %2021 = vmatmul.f32.gmra.mxu0 %v1907
        %v2022 = vpop.f32.mrf.mxu0
        %v2023 = vadd.f32 0.0, %v2022
        %2024 = vmatmul.f32.gmra.mxu0 %v1910
        %v2025 = vpop.f32.mrf.mxu0
        %v2026 = vadd.f32 0.0, %v2025
        %2027 = vmatmul.f32.gmra.mxu0 %v1913
        %v2028 = vpop.f32.mrf.mxu0
        %v2029 = vadd.f32 0.0, %v2028
        %2030 = vmatmul.f32.gmra.mxu0 %v1916
        %v2031 = vpop.f32.mrf.mxu0
        %v2032 = vadd.f32 0.0, %v2031
        %2033 = vmatmul.f32.gmra.mxu0 %v1919
        %v2034 = vpop.f32.mrf.mxu0
        %v2035 = vadd.f32 0.0, %v2034
        %2036 = vmatmul.f32.gmra.mxu0 %v1922
        %v2037 = vpop.f32.mrf.mxu0
        %v2038 = vadd.f32 0.0, %v2037
        %2039 = vmatmul.f32.gmra.mxu0 %v1925
        %v2040 = vpop.f32.mrf.mxu0
        %v2041 = vadd.f32 0.0, %v2040
        %2042 = vmatmul.f32.gmra.mxu0 %v1928
        %v2043 = vpop.f32.mrf.mxu0
        %v2044 = vadd.f32 0.0, %v2043
        %2045 = vmatmul.f32.gmra.mxu0 %v1931
        %v2046 = vpop.f32.mrf.mxu0
        %v2047 = vadd.f32 0.0, %v2046
        %2048 = vdwg.mxu0
        %v2049 = vadd.f32 %v1770, %v1954
        %v2050 = vadd.f32 %v1771, %v1957
        %v2051 = vadd.f32 %v1772, %v1960
        %v2052 = vadd.f32 %v1773, %v1963
        %v2053 = vadd.f32 %v1774, %v1966
        %v2054 = vadd.f32 %v1775, %v1969
        %v2055 = vadd.f32 %v1776, %v1972
        %v2056 = vadd.f32 %v1777, %v1975
        %v2057 = vadd.f32 %v1778, %v1978
        %v2058 = vadd.f32 %v1779, %v1981
        %v2059 = vadd.f32 %v1780, %v1984
        %v2060 = vadd.f32 %v1781, %v1987
        %v2061 = vadd.f32 %v1782, %v1990
        %v2062 = vadd.f32 %v1783, %v1993
        %v2063 = vadd.f32 %v1784, %v1996
        %v2064 = vadd.f32 %v1785, %v1999
        %v2065 = vadd.f32 %v1786, %v2002
        %v2066 = vadd.f32 %v1787, %v2005
        %v2067 = vadd.f32 %v1788, %v2008
        %v2068 = vadd.f32 %v1789, %v2011
        %v2069 = vadd.f32 %v1790, %v2014
        %v2070 = vadd.f32 %v1791, %v2017
        %v2071 = vadd.f32 %v1792, %v2020
        %v2072 = vadd.f32 %v1793, %v2023
        %v2073 = vadd.f32 %v1794, %v2026
        %v2074 = vadd.f32 %v1795, %v2029
        %v2075 = vadd.f32 %v1796, %v2032
        %v2076 = vadd.f32 %v1797, %v2035
        %v2077 = vadd.f32 %v1798, %v2038
        %v2078 = vadd.f32 %v1799, %v2041
        %v2079 = vadd.f32 %v1800, %v2044
        %v2080 = vadd.f32 %v1801, %v2047
        %v2081 = vld [vmem:[%s1802 + $0x1] sm:$0xff]
        %v2082 = vld [vmem:[%s1802 + $0x9] sm:$0xff]
        %v2083 = vld [vmem:[%s1802 + $0x19] sm:$0xff]
        %v2084 = vld [vmem:[%s1802 + $0x21] sm:$0xff]
        %v2085 = vld [vmem:[%s1802 + $0x31] sm:$0xff]
        %v2086 = vld [vmem:[%s1802 + $0x39] sm:$0xff]
        %v2087 = vld [vmem:[%s1802 + $0x49] sm:$0xff]
        %v2088 = vld [vmem:[%s1802 + $0x51] sm:$0xff]
        %v2089 = vld [vmem:[%s1802 + $0x61] sm:$0xff]
        %v2090 = vld [vmem:[%s1802 + $0x69] sm:$0xff]
        %v2091 = vld [vmem:[%s1802 + $0x79] sm:$0xff]
        %v2092 = vld [vmem:[%s1802 + $0x81] sm:$0xff]
        %v2093 = vld [vmem:[%s1802 + $0x91] sm:$0xff]
        %v2094 = vld [vmem:[%s1802 + $0x99] sm:$0xff]
        %v2095 = vld [vmem:[%s1802 + $0xa9] sm:$0xff]
        %v2096 = vld [vmem:[%s1802 + $0xb1] sm:$0xff]
        %v2097 = vld [vmem:[%s1802 + $0xc1] sm:$0xff]
        %v2098 = vld [vmem:[%s1802 + $0xc9] sm:$0xff]
        %v2099 = vld [vmem:[%s1802 + $0xd9] sm:$0xff]
        %v2100 = vld [vmem:[%s1802 + $0xe1] sm:$0xff]
        %v2101 = vld [vmem:[%s1802 + $0xf1] sm:$0xff]
        %v2102 = vld [vmem:[%s1802 + $0xf9] sm:$0xff]
        %v2103 = vld [vmem:[%s1802 + $0x109] sm:$0xff]
        %v2104 = vld [vmem:[%s1802 + $0x111] sm:$0xff]
        %v2105 = vld [vmem:[%s1802 + $0x121] sm:$0xff]
        %v2106 = vld [vmem:[%s1802 + $0x129] sm:$0xff]
        %v2107 = vld [vmem:[%s1802 + $0x139] sm:$0xff]
        %v2108 = vld [vmem:[%s1802 + $0x141] sm:$0xff]
        %v2109 = vld [vmem:[%s1802 + $0x151] sm:$0xff]
        %v2110 = vld [vmem:[%s1802 + $0x159] sm:$0xff]
        %v2111 = vld [vmem:[%s1802 + $0x169] sm:$0xff]
        %v2112 = vld [vmem:[%s1802 + $0x171] sm:$0xff]
        %s2113 = scalar_lea.vmem %s1, 28
        %v2114 = vld [vmem:[%s2113] sm:$0x7]
        %v2116 = vsel %vm263, %v2081, 0
        %v2119 = vsel %vm263, %v2082, 0
        %v2122 = vsel %vm263, %v2083, 0
        %v2125 = vsel %vm263, %v2084, 0
        %v2128 = vsel %vm263, %v2085, 0
        %v2131 = vsel %vm263, %v2086, 0
        %v2134 = vsel %vm263, %v2087, 0
        %v2137 = vsel %vm263, %v2088, 0
        %v2140 = vsel %vm263, %v2089, 0
        %v2143 = vsel %vm263, %v2090, 0
        %v2146 = vsel %vm263, %v2091, 0
        %v2149 = vsel %vm263, %v2092, 0
        %v2152 = vsel %vm263, %v2093, 0
        %v2155 = vsel %vm263, %v2094, 0
        %v2158 = vsel %vm263, %v2095, 0
        %v2161 = vsel %vm263, %v2096, 0
        %v2164 = vsel %vm263, %v2097, 0
        %v2167 = vsel %vm263, %v2098, 0
        %v2170 = vsel %vm263, %v2099, 0
        %v2173 = vsel %vm263, %v2100, 0
        %v2176 = vsel %vm263, %v2101, 0
        %v2179 = vsel %vm263, %v2102, 0
        %v2182 = vsel %vm263, %v2103, 0
        %v2185 = vsel %vm263, %v2104, 0
        %v2188 = vsel %vm263, %v2105, 0
        %v2191 = vsel %vm263, %v2106, 0
        %v2194 = vsel %vm263, %v2107, 0
        %v2197 = vsel %vm263, %v2108, 0
        %v2200 = vsel %vm263, %v2109, 0
        %v2203 = vsel %vm263, %v2110, 0
        %v2206 = vsel %vm263, %v2111, 0
        %v2209 = vsel %vm263, %v2112, 0
        %v2212 = vsel %vm360, %v2114, 0
        %2214 = vmatpush.msra.mxu0 0.0
        %2215 = vmatpush.msra.mxu0 0.0
        %2216 = vmatpush.msra.mxu0 0.0
        %2217 = vmatpush.msra.mxu0 0.0
        %2218 = vmatpush.msra.mxu0 0.0
        %2219 = vmatpush.msra.mxu0 0.0
        %2220 = vmatpush.msra.mxu0 0.0
        %2221 = vmatpush.msra.mxu0 0.0
        %2222 = vmatpush.msra.mxu0 0.0
        %2223 = vmatpush.msra.mxu0 0.0
        %2224 = vmatpush.msra.mxu0 0.0
        %2225 = vmatpush.msra.mxu0 0.0
        %2226 = vmatpush.msra.mxu0 0.0
        %2227 = vmatpush.msra.mxu0 0.0
        %2228 = vmatpush.msra.mxu0 0.0
        %2229 = vmatpush.msra.mxu0 %v2212
        %2230 = vmatmul.f32.gmra.mxu0 %v2116
        %v2231 = vpop.f32.mrf.mxu0
        %v2232 = vadd.f32 0.0, %v2231
        %2233 = vmatmul.f32.gmra.mxu0 %v2119
        %v2234 = vpop.f32.mrf.mxu0
        %v2235 = vadd.f32 0.0, %v2234
        %2236 = vmatmul.f32.gmra.mxu0 %v2122
        %v2237 = vpop.f32.mrf.mxu0
        %v2238 = vadd.f32 0.0, %v2237
        %2239 = vmatmul.f32.gmra.mxu0 %v2125
        %v2240 = vpop.f32.mrf.mxu0
        %v2241 = vadd.f32 0.0, %v2240
        %2242 = vmatmul.f32.gmra.mxu0 %v2128
        %v2243 = vpop.f32.mrf.mxu0
        %v2244 = vadd.f32 0.0, %v2243
        %2245 = vmatmul.f32.gmra.mxu0 %v2131
        %v2246 = vpop.f32.mrf.mxu0
        %v2247 = vadd.f32 0.0, %v2246
        %2248 = vmatmul.f32.gmra.mxu0 %v2134
        %v2249 = vpop.f32.mrf.mxu0
        %v2250 = vadd.f32 0.0, %v2249
        %2251 = vmatmul.f32.gmra.mxu0 %v2137
        %v2252 = vpop.f32.mrf.mxu0
        %v2253 = vadd.f32 0.0, %v2252
        %2254 = vmatmul.f32.gmra.mxu0 %v2140
        %v2255 = vpop.f32.mrf.mxu0
        %v2256 = vadd.f32 0.0, %v2255
        %2257 = vmatmul.f32.gmra.mxu0 %v2143
        %v2258 = vpop.f32.mrf.mxu0
        %v2259 = vadd.f32 0.0, %v2258
        %2260 = vmatmul.f32.gmra.mxu0 %v2146
        %v2261 = vpop.f32.mrf.mxu0
        %v2262 = vadd.f32 0.0, %v2261
        %2263 = vmatmul.f32.gmra.mxu0 %v2149
        %v2264 = vpop.f32.mrf.mxu0
        %v2265 = vadd.f32 0.0, %v2264
        %2266 = vmatmul.f32.gmra.mxu0 %v2152
        %v2267 = vpop.f32.mrf.mxu0
        %v2268 = vadd.f32 0.0, %v2267
        %2269 = vmatmul.f32.gmra.mxu0 %v2155
        %v2270 = vpop.f32.mrf.mxu0
        %v2271 = vadd.f32 0.0, %v2270
        %2272 = vmatmul.f32.gmra.mxu0 %v2158
        %v2273 = vpop.f32.mrf.mxu0
        %v2274 = vadd.f32 0.0, %v2273
        %2275 = vmatmul.f32.gmra.mxu0 %v2161
        %v2276 = vpop.f32.mrf.mxu0
        %v2277 = vadd.f32 0.0, %v2276
        %2278 = vmatmul.f32.gmra.mxu0 %v2164
        %v2279 = vpop.f32.mrf.mxu0
        %v2280 = vadd.f32 0.0, %v2279
        %2281 = vmatmul.f32.gmra.mxu0 %v2167
        %v2282 = vpop.f32.mrf.mxu0
        %v2283 = vadd.f32 0.0, %v2282
        %2284 = vmatmul.f32.gmra.mxu0 %v2170
        %v2285 = vpop.f32.mrf.mxu0
        %v2286 = vadd.f32 0.0, %v2285
        %2287 = vmatmul.f32.gmra.mxu0 %v2173
        %v2288 = vpop.f32.mrf.mxu0
        %v2289 = vadd.f32 0.0, %v2288
        %2290 = vmatmul.f32.gmra.mxu0 %v2176
        %v2291 = vpop.f32.mrf.mxu0
        %v2292 = vadd.f32 0.0, %v2291
        %2293 = vmatmul.f32.gmra.mxu0 %v2179
        %v2294 = vpop.f32.mrf.mxu0
        %v2295 = vadd.f32 0.0, %v2294
        %2296 = vmatmul.f32.gmra.mxu0 %v2182
        %v2297 = vpop.f32.mrf.mxu0
        %v2298 = vadd.f32 0.0, %v2297
        %2299 = vmatmul.f32.gmra.mxu0 %v2185
        %v2300 = vpop.f32.mrf.mxu0
        %v2301 = vadd.f32 0.0, %v2300
        %2302 = vmatmul.f32.gmra.mxu0 %v2188
        %v2303 = vpop.f32.mrf.mxu0
        %v2304 = vadd.f32 0.0, %v2303
        %2305 = vmatmul.f32.gmra.mxu0 %v2191
        %v2306 = vpop.f32.mrf.mxu0
        %v2307 = vadd.f32 0.0, %v2306
        %2308 = vmatmul.f32.gmra.mxu0 %v2194
        %v2309 = vpop.f32.mrf.mxu0
        %v2310 = vadd.f32 0.0, %v2309
        %2311 = vmatmul.f32.gmra.mxu0 %v2197
        %v2312 = vpop.f32.mrf.mxu0
        %v2313 = vadd.f32 0.0, %v2312
        %2314 = vmatmul.f32.gmra.mxu0 %v2200
        %v2315 = vpop.f32.mrf.mxu0
        %v2316 = vadd.f32 0.0, %v2315
        %2317 = vmatmul.f32.gmra.mxu0 %v2203
        %v2318 = vpop.f32.mrf.mxu0
        %v2319 = vadd.f32 0.0, %v2318
        %2320 = vmatmul.f32.gmra.mxu0 %v2206
        %v2321 = vpop.f32.mrf.mxu0
        %v2322 = vadd.f32 0.0, %v2321
        %2323 = vmatmul.f32.gmra.mxu0 %v2209
        %v2324 = vpop.f32.mrf.mxu0
        %v2325 = vadd.f32 0.0, %v2324
        %2326 = vdwg.mxu0
        %v2327 = vadd.f32 %v2049, %v2232
        %v2328 = vadd.f32 %v2050, %v2235
        %v2329 = vadd.f32 %v2051, %v2238
        %v2330 = vadd.f32 %v2052, %v2241
        %v2331 = vadd.f32 %v2053, %v2244
        %v2332 = vadd.f32 %v2054, %v2247
        %v2333 = vadd.f32 %v2055, %v2250
        %v2334 = vadd.f32 %v2056, %v2253
        %v2335 = vadd.f32 %v2057, %v2256
        %v2336 = vadd.f32 %v2058, %v2259
        %v2337 = vadd.f32 %v2059, %v2262
        %v2338 = vadd.f32 %v2060, %v2265
        %v2339 = vadd.f32 %v2061, %v2268
        %v2340 = vadd.f32 %v2062, %v2271
        %v2341 = vadd.f32 %v2063, %v2274
        %v2342 = vadd.f32 %v2064, %v2277
        %v2343 = vadd.f32 %v2065, %v2280
        %v2344 = vadd.f32 %v2066, %v2283
        %v2345 = vadd.f32 %v2067, %v2286
        %v2346 = vadd.f32 %v2068, %v2289
        %v2347 = vadd.f32 %v2069, %v2292
        %v2348 = vadd.f32 %v2070, %v2295
        %v2349 = vadd.f32 %v2071, %v2298
        %v2350 = vadd.f32 %v2072, %v2301
        %v2351 = vadd.f32 %v2073, %v2304
        %v2352 = vadd.f32 %v2074, %v2307
        %v2353 = vadd.f32 %v2075, %v2310
        %v2354 = vadd.f32 %v2076, %v2313
        %v2355 = vadd.f32 %v2077, %v2316
        %v2356 = vadd.f32 %v2078, %v2319
        %v2357 = vadd.f32 %v2079, %v2322
        %v2358 = vadd.f32 %v2080, %v2325
        %v2359 = vld [vmem:[%s1802 + $0x2] sm:$0xff]
        %v2360 = vld [vmem:[%s1802 + $0xa] sm:$0xff]
        %v2361 = vld [vmem:[%s1802 + $0x1a] sm:$0xff]
        %v2362 = vld [vmem:[%s1802 + $0x22] sm:$0xff]
        %v2363 = vld [vmem:[%s1802 + $0x32] sm:$0xff]
        %v2364 = vld [vmem:[%s1802 + $0x3a] sm:$0xff]
        %v2365 = vld [vmem:[%s1802 + $0x4a] sm:$0xff]
        %v2366 = vld [vmem:[%s1802 + $0x52] sm:$0xff]
        %v2367 = vld [vmem:[%s1802 + $0x62] sm:$0xff]
        %v2368 = vld [vmem:[%s1802 + $0x6a] sm:$0xff]
        %v2369 = vld [vmem:[%s1802 + $0x7a] sm:$0xff]
        %v2370 = vld [vmem:[%s1802 + $0x82] sm:$0xff]
        %v2371 = vld [vmem:[%s1802 + $0x92] sm:$0xff]
        %v2372 = vld [vmem:[%s1802 + $0x9a] sm:$0xff]
        %v2373 = vld [vmem:[%s1802 + $0xaa] sm:$0xff]
        %v2374 = vld [vmem:[%s1802 + $0xb2] sm:$0xff]
        %v2375 = vld [vmem:[%s1802 + $0xc2] sm:$0xff]
        %v2376 = vld [vmem:[%s1802 + $0xca] sm:$0xff]
        %v2377 = vld [vmem:[%s1802 + $0xda] sm:$0xff]
        %v2378 = vld [vmem:[%s1802 + $0xe2] sm:$0xff]
        %v2379 = vld [vmem:[%s1802 + $0xf2] sm:$0xff]
        %v2380 = vld [vmem:[%s1802 + $0xfa] sm:$0xff]
        %v2381 = vld [vmem:[%s1802 + $0x10a] sm:$0xff]
        %v2382 = vld [vmem:[%s1802 + $0x112] sm:$0xff]
        %v2383 = vld [vmem:[%s1802 + $0x122] sm:$0xff]
        %v2384 = vld [vmem:[%s1802 + $0x12a] sm:$0xff]
        %v2385 = vld [vmem:[%s1802 + $0x13a] sm:$0xff]
        %v2386 = vld [vmem:[%s1802 + $0x142] sm:$0xff]
        %v2387 = vld [vmem:[%s1802 + $0x152] sm:$0xff]
        %v2388 = vld [vmem:[%s1802 + $0x15a] sm:$0xff]
        %v2389 = vld [vmem:[%s1802 + $0x16a] sm:$0xff]
        %v2390 = vld [vmem:[%s1802 + $0x172] sm:$0xff]
        %s2391 = scalar_lea.vmem %s1, 32
        %v2392 = vld [vmem:[%s2391] sm:$0x7]
        %v2394 = vsel %vm263, %v2359, 0
        %v2397 = vsel %vm263, %v2360, 0
        %v2400 = vsel %vm263, %v2361, 0
        %v2403 = vsel %vm263, %v2362, 0
        %v2406 = vsel %vm263, %v2363, 0
        %v2409 = vsel %vm263, %v2364, 0
        %v2412 = vsel %vm263, %v2365, 0
        %v2415 = vsel %vm263, %v2366, 0
        %v2418 = vsel %vm263, %v2367, 0
        %v2421 = vsel %vm263, %v2368, 0
        %v2424 = vsel %vm263, %v2369, 0
        %v2427 = vsel %vm263, %v2370, 0
        %v2430 = vsel %vm263, %v2371, 0
        %v2433 = vsel %vm263, %v2372, 0
        %v2436 = vsel %vm263, %v2373, 0
        %v2439 = vsel %vm263, %v2374, 0
        %v2442 = vsel %vm263, %v2375, 0
        %v2445 = vsel %vm263, %v2376, 0
        %v2448 = vsel %vm263, %v2377, 0
        %v2451 = vsel %vm263, %v2378, 0
        %v2454 = vsel %vm263, %v2379, 0
        %v2457 = vsel %vm263, %v2380, 0
        %v2460 = vsel %vm263, %v2381, 0
        %v2463 = vsel %vm263, %v2382, 0
        %v2466 = vsel %vm263, %v2383, 0
        %v2469 = vsel %vm263, %v2384, 0
        %v2472 = vsel %vm263, %v2385, 0
        %v2475 = vsel %vm263, %v2386, 0
        %v2478 = vsel %vm263, %v2387, 0
        %v2481 = vsel %vm263, %v2388, 0
        %v2484 = vsel %vm263, %v2389, 0
        %v2487 = vsel %vm263, %v2390, 0
        %v2490 = vsel %vm360, %v2392, 0
        %2492 = vmatpush.msra.mxu0 0.0
        %2493 = vmatpush.msra.mxu0 0.0
        %2494 = vmatpush.msra.mxu0 0.0
        %2495 = vmatpush.msra.mxu0 0.0
        %2496 = vmatpush.msra.mxu0 0.0
        %2497 = vmatpush.msra.mxu0 0.0
        %2498 = vmatpush.msra.mxu0 0.0
        %2499 = vmatpush.msra.mxu0 0.0
        %2500 = vmatpush.msra.mxu0 0.0
        %2501 = vmatpush.msra.mxu0 0.0
        %2502 = vmatpush.msra.mxu0 0.0
        %2503 = vmatpush.msra.mxu0 0.0
        %2504 = vmatpush.msra.mxu0 0.0
        %2505 = vmatpush.msra.mxu0 0.0
        %2506 = vmatpush.msra.mxu0 0.0
        %2507 = vmatpush.msra.mxu0 %v2490
        %2508 = vmatmul.f32.gmra.mxu0 %v2394
        %v2509 = vpop.f32.mrf.mxu0
        %v2510 = vadd.f32 0.0, %v2509
        %2511 = vmatmul.f32.gmra.mxu0 %v2397
        %v2512 = vpop.f32.mrf.mxu0
        %v2513 = vadd.f32 0.0, %v2512
        %2514 = vmatmul.f32.gmra.mxu0 %v2400
        %v2515 = vpop.f32.mrf.mxu0
        %v2516 = vadd.f32 0.0, %v2515
        %2517 = vmatmul.f32.gmra.mxu0 %v2403
        %v2518 = vpop.f32.mrf.mxu0
        %v2519 = vadd.f32 0.0, %v2518
        %2520 = vmatmul.f32.gmra.mxu0 %v2406
        %v2521 = vpop.f32.mrf.mxu0
        %v2522 = vadd.f32 0.0, %v2521
        %2523 = vmatmul.f32.gmra.mxu0 %v2409
        %v2524 = vpop.f32.mrf.mxu0
        %v2525 = vadd.f32 0.0, %v2524
        %2526 = vmatmul.f32.gmra.mxu0 %v2412
        %v2527 = vpop.f32.mrf.mxu0
        %v2528 = vadd.f32 0.0, %v2527
        %2529 = vmatmul.f32.gmra.mxu0 %v2415
        %v2530 = vpop.f32.mrf.mxu0
        %v2531 = vadd.f32 0.0, %v2530
        %2532 = vmatmul.f32.gmra.mxu0 %v2418
        %v2533 = vpop.f32.mrf.mxu0
        %v2534 = vadd.f32 0.0, %v2533
        %2535 = vmatmul.f32.gmra.mxu0 %v2421
        %v2536 = vpop.f32.mrf.mxu0
        %v2537 = vadd.f32 0.0, %v2536
        %2538 = vmatmul.f32.gmra.mxu0 %v2424
        %v2539 = vpop.f32.mrf.mxu0
        %v2540 = vadd.f32 0.0, %v2539
        %2541 = vmatmul.f32.gmra.mxu0 %v2427
        %v2542 = vpop.f32.mrf.mxu0
        %v2543 = vadd.f32 0.0, %v2542
        %2544 = vmatmul.f32.gmra.mxu0 %v2430
        %v2545 = vpop.f32.mrf.mxu0
        %v2546 = vadd.f32 0.0, %v2545
        %2547 = vmatmul.f32.gmra.mxu0 %v2433
        %v2548 = vpop.f32.mrf.mxu0
        %v2549 = vadd.f32 0.0, %v2548
        %2550 = vmatmul.f32.gmra.mxu0 %v2436
        %v2551 = vpop.f32.mrf.mxu0
        %v2552 = vadd.f32 0.0, %v2551
        %2553 = vmatmul.f32.gmra.mxu0 %v2439
        %v2554 = vpop.f32.mrf.mxu0
        %v2555 = vadd.f32 0.0, %v2554
        %2556 = vmatmul.f32.gmra.mxu0 %v2442
        %v2557 = vpop.f32.mrf.mxu0
        %v2558 = vadd.f32 0.0, %v2557
        %2559 = vmatmul.f32.gmra.mxu0 %v2445
        %v2560 = vpop.f32.mrf.mxu0
        %v2561 = vadd.f32 0.0, %v2560
        %2562 = vmatmul.f32.gmra.mxu0 %v2448
        %v2563 = vpop.f32.mrf.mxu0
        %v2564 = vadd.f32 0.0, %v2563
        %2565 = vmatmul.f32.gmra.mxu0 %v2451
        %v2566 = vpop.f32.mrf.mxu0
        %v2567 = vadd.f32 0.0, %v2566
        %2568 = vmatmul.f32.gmra.mxu0 %v2454
        %v2569 = vpop.f32.mrf.mxu0
        %v2570 = vadd.f32 0.0, %v2569
        %2571 = vmatmul.f32.gmra.mxu0 %v2457
        %v2572 = vpop.f32.mrf.mxu0
        %v2573 = vadd.f32 0.0, %v2572
        %2574 = vmatmul.f32.gmra.mxu0 %v2460
        %v2575 = vpop.f32.mrf.mxu0
        %v2576 = vadd.f32 0.0, %v2575
        %2577 = vmatmul.f32.gmra.mxu0 %v2463
        %v2578 = vpop.f32.mrf.mxu0
        %v2579 = vadd.f32 0.0, %v2578
        %2580 = vmatmul.f32.gmra.mxu0 %v2466
        %v2581 = vpop.f32.mrf.mxu0
        %v2582 = vadd.f32 0.0, %v2581
        %2583 = vmatmul.f32.gmra.mxu0 %v2469
        %v2584 = vpop.f32.mrf.mxu0
        %v2585 = vadd.f32 0.0, %v2584
        %2586 = vmatmul.f32.gmra.mxu0 %v2472
        %v2587 = vpop.f32.mrf.mxu0
        %v2588 = vadd.f32 0.0, %v2587
        %2589 = vmatmul.f32.gmra.mxu0 %v2475
        %v2590 = vpop.f32.mrf.mxu0
        %v2591 = vadd.f32 0.0, %v2590
        %2592 = vmatmul.f32.gmra.mxu0 %v2478
        %v2593 = vpop.f32.mrf.mxu0
        %v2594 = vadd.f32 0.0, %v2593
        %2595 = vmatmul.f32.gmra.mxu0 %v2481
        %v2596 = vpop.f32.mrf.mxu0
        %v2597 = vadd.f32 0.0, %v2596
        %2598 = vmatmul.f32.gmra.mxu0 %v2484
        %v2599 = vpop.f32.mrf.mxu0
        %v2600 = vadd.f32 0.0, %v2599
        %2601 = vmatmul.f32.gmra.mxu0 %v2487
        %v2602 = vpop.f32.mrf.mxu0
        %v2603 = vadd.f32 0.0, %v2602
        %2604 = vdwg.mxu0
        %v2605 = vadd.f32 %v2327, %v2510
        %v2606 = vadd.f32 %v2328, %v2513
        %v2607 = vadd.f32 %v2329, %v2516
        %v2608 = vadd.f32 %v2330, %v2519
        %v2609 = vadd.f32 %v2331, %v2522
        %v2610 = vadd.f32 %v2332, %v2525
        %v2611 = vadd.f32 %v2333, %v2528
        %v2612 = vadd.f32 %v2334, %v2531
        %v2613 = vadd.f32 %v2335, %v2534
        %v2614 = vadd.f32 %v2336, %v2537
        %v2615 = vadd.f32 %v2337, %v2540
        %v2616 = vadd.f32 %v2338, %v2543
        %v2617 = vadd.f32 %v2339, %v2546
        %v2618 = vadd.f32 %v2340, %v2549
        %v2619 = vadd.f32 %v2341, %v2552
        %v2620 = vadd.f32 %v2342, %v2555
        %v2621 = vadd.f32 %v2343, %v2558
        %v2622 = vadd.f32 %v2344, %v2561
        %v2623 = vadd.f32 %v2345, %v2564
        %v2624 = vadd.f32 %v2346, %v2567
        %v2625 = vadd.f32 %v2347, %v2570
        %v2626 = vadd.f32 %v2348, %v2573
        %v2627 = vadd.f32 %v2349, %v2576
        %v2628 = vadd.f32 %v2350, %v2579
        %v2629 = vadd.f32 %v2351, %v2582
        %v2630 = vadd.f32 %v2352, %v2585
        %v2631 = vadd.f32 %v2353, %v2588
        %v2632 = vadd.f32 %v2354, %v2591
        %v2633 = vadd.f32 %v2355, %v2594
        %v2634 = vadd.f32 %v2356, %v2597
        %v2635 = vadd.f32 %v2357, %v2600
        %v2636 = vadd.f32 %v2358, %v2603
        %v2637 = vld [vmem:[%s2] sm:$0x1]
        %v2639 = vperm.slane %v2637, 0
        %v2641 = vmul.f32 %v2605, %v2639
        %v2642 = vmul.f32 %v2606, %v2639
        %v2643 = vmul.f32 %v2607, %v2639
        %v2644 = vmul.f32 %v2608, %v2639
        %v2645 = vmul.f32 %v2609, %v2639
        %v2646 = vmul.f32 %v2610, %v2639
        %v2647 = vmul.f32 %v2611, %v2639
        %v2648 = vmul.f32 %v2612, %v2639
        %v2649 = vmul.f32 %v2613, %v2639
        %v2650 = vmul.f32 %v2614, %v2639
        %v2651 = vmul.f32 %v2615, %v2639
        %v2652 = vmul.f32 %v2616, %v2639
        %v2653 = vmul.f32 %v2617, %v2639
        %v2654 = vmul.f32 %v2618, %v2639
        %v2655 = vmul.f32 %v2619, %v2639
        %v2656 = vmul.f32 %v2620, %v2639
        %v2657 = vmul.f32 %v2621, %v2639
        %v2658 = vmul.f32 %v2622, %v2639
        %v2659 = vmul.f32 %v2623, %v2639
        %v2660 = vmul.f32 %v2624, %v2639
        %v2661 = vmul.f32 %v2625, %v2639
        %v2662 = vmul.f32 %v2626, %v2639
        %v2663 = vmul.f32 %v2627, %v2639
        %v2664 = vmul.f32 %v2628, %v2639
        %v2665 = vmul.f32 %v2629, %v2639
        %v2666 = vmul.f32 %v2630, %v2639
        %v2667 = vmul.f32 %v2631, %v2639
        %v2668 = vmul.f32 %v2632, %v2639
        %v2669 = vmul.f32 %v2633, %v2639
        %v2670 = vmul.f32 %v2634, %v2639
        %v2671 = vmul.f32 %v2635, %v2639
        %v2672 = vmul.f32 %v2636, %v2639
        %v2673 = vld [vmem:[%s3] sm:$0x1]
        %v2675 = vperm.slane %v2673, 0
        %v2677 = vadd.f32 %v2641, %v2675
        %v2678 = vadd.f32 %v2642, %v2675
        %v2679 = vadd.f32 %v2643, %v2675
        %v2680 = vadd.f32 %v2644, %v2675
        %v2681 = vadd.f32 %v2645, %v2675
        %v2682 = vadd.f32 %v2646, %v2675
        %v2683 = vadd.f32 %v2647, %v2675
        %v2684 = vadd.f32 %v2648, %v2675
        %v2685 = vadd.f32 %v2649, %v2675
        %v2686 = vadd.f32 %v2650, %v2675
        %v2687 = vadd.f32 %v2651, %v2675
        %v2688 = vadd.f32 %v2652, %v2675
        %v2689 = vadd.f32 %v2653, %v2675
        %v2690 = vadd.f32 %v2654, %v2675
        %v2691 = vadd.f32 %v2655, %v2675
        %v2692 = vadd.f32 %v2656, %v2675
        %v2693 = vadd.f32 %v2657, %v2675
        %v2694 = vadd.f32 %v2658, %v2675
        %v2695 = vadd.f32 %v2659, %v2675
        %v2696 = vadd.f32 %v2660, %v2675
        %v2697 = vadd.f32 %v2661, %v2675
        %v2698 = vadd.f32 %v2662, %v2675
        %v2699 = vadd.f32 %v2663, %v2675
        %v2700 = vadd.f32 %v2664, %v2675
        %v2701 = vadd.f32 %v2665, %v2675
        %v2702 = vadd.f32 %v2666, %v2675
        %v2703 = vadd.f32 %v2667, %v2675
        %v2704 = vadd.f32 %v2668, %v2675
        %v2705 = vadd.f32 %v2669, %v2675
        %v2706 = vadd.f32 %v2670, %v2675
        %v2707 = vadd.f32 %v2671, %v2675
        %v2708 = vadd.f32 %v2672, %v2675
        %v2709 = vmax.f32 %v2677, 0.0
        %v2710 = vmax.f32 %v2678, 0.0
        %v2711 = vmax.f32 %v2679, 0.0
        %v2712 = vmax.f32 %v2680, 0.0
        %v2713 = vmax.f32 %v2681, 0.0
        %v2714 = vmax.f32 %v2682, 0.0
        %v2715 = vmax.f32 %v2683, 0.0
        %v2716 = vmax.f32 %v2684, 0.0
        %v2717 = vmax.f32 %v2685, 0.0
        %v2718 = vmax.f32 %v2686, 0.0
        %v2719 = vmax.f32 %v2687, 0.0
        %v2720 = vmax.f32 %v2688, 0.0
        %v2721 = vmax.f32 %v2689, 0.0
        %v2722 = vmax.f32 %v2690, 0.0
        %v2723 = vmax.f32 %v2691, 0.0
        %v2724 = vmax.f32 %v2692, 0.0
        %v2725 = vmax.f32 %v2693, 0.0
        %v2726 = vmax.f32 %v2694, 0.0
        %v2727 = vmax.f32 %v2695, 0.0
        %v2728 = vmax.f32 %v2696, 0.0
        %v2729 = vmax.f32 %v2697, 0.0
        %v2730 = vmax.f32 %v2698, 0.0
        %v2731 = vmax.f32 %v2699, 0.0
        %v2732 = vmax.f32 %v2700, 0.0
        %v2733 = vmax.f32 %v2701, 0.0
        %v2734 = vmax.f32 %v2702, 0.0
        %v2735 = vmax.f32 %v2703, 0.0
        %v2736 = vmax.f32 %v2704, 0.0
        %v2737 = vmax.f32 %v2705, 0.0
        %v2738 = vmax.f32 %v2706, 0.0
        %v2739 = vmax.f32 %v2707, 0.0
        %v2740 = vmax.f32 %v2708, 0.0
        %v2741 = vmax.f32 %v2709, %v2711
        %v2742 = vmax.f32 %v2710, %v2712
        %v2743 = vmax.f32 %v2713, %v2715
        %v2744 = vmax.f32 %v2714, %v2716
        %v2745 = vmax.f32 %v2717, %v2719
        %v2746 = vmax.f32 %v2718, %v2720
        %v2747 = vmax.f32 %v2721, %v2723
        %v2748 = vmax.f32 %v2722, %v2724
        %v2749 = vmax.f32 %v2725, %v2727
        %v2750 = vmax.f32 %v2726, %v2728
        %v2751 = vmax.f32 %v2729, %v2731
        %v2752 = vmax.f32 %v2730, %v2732
        %v2753 = vmax.f32 %v2733, %v2735
        %v2754 = vmax.f32 %v2734, %v2736
        %v2755 = vmax.f32 %v2737, %v2739
        %v2756 = vmax.f32 %v2738, %v2740
        %vm2757 = vcmask 523264
        %2758 = vst.msk [vmem:[#allocation2] sm:$0xff] %vm2757, %v2741
        %2759 = vst.msk [vmem:[#allocation2 + $0x8] sm:$0xff] %vm2757, %v2742
        %2760 = vst.msk [vmem:[#allocation2 + $0x10] sm:$0xff] %vm2757, %v2743
        %2761 = vst.msk [vmem:[#allocation2 + $0x18] sm:$0xff] %vm2757, %v2744
        %2762 = vst.msk [vmem:[#allocation2 + $0x20] sm:$0xff] %vm2757, %v2745
        %2763 = vst.msk [vmem:[#allocation2 + $0x28] sm:$0xff] %vm2757, %v2746
        %2764 = vst.msk [vmem:[#allocation2 + $0x30] sm:$0xff] %vm2757, %v2747
        %2765 = vst.msk [vmem:[#allocation2 + $0x38] sm:$0xff] %vm2757, %v2748
        %2766 = vst.msk [vmem:[#allocation2 + $0x40] sm:$0xff] %vm2757, %v2749
        %2767 = vst.msk [vmem:[#allocation2 + $0x48] sm:$0xff] %vm2757, %v2750
        %2768 = vst.msk [vmem:[#allocation2 + $0x50] sm:$0xff] %vm2757, %v2751
        %2769 = vst.msk [vmem:[#allocation2 + $0x58] sm:$0xff] %vm2757, %v2752
        %2770 = vst.msk [vmem:[#allocation2 + $0x60] sm:$0xff] %vm2757, %v2753
        %2771 = vst.msk [vmem:[#allocation2 + $0x68] sm:$0xff] %vm2757, %v2754
        %2772 = vst.msk [vmem:[#allocation2 + $0x70] sm:$0xff] %vm2757, %v2755
        %2773 = vst.msk [vmem:[#allocation2 + $0x78] sm:$0xff] %vm2757, %v2756
        %v2774 = vld [vmem:[#allocation2] ss:$2 sm:$0xff]
        %s2775 = scalar_lea.vmem [#allocation2], 16
        %v2776 = vld [vmem:[%s2775] ss:$2 sm:$0xff]
        %s2777 = scalar_lea.vmem [#allocation2], 32
        %v2778 = vld [vmem:[%s2777] ss:$2 sm:$0xff]
        %s2779 = scalar_lea.vmem [#allocation2], 48
        %v2780 = vld [vmem:[%s2779] ss:$2 sm:$0xff]
        %s2781 = scalar_lea.vmem [#allocation2], 64
        %v2782 = vld [vmem:[%s2781] ss:$2 sm:$0xff]
        %s2783 = scalar_lea.vmem [#allocation2], 80
        %v2784 = vld [vmem:[%s2783] ss:$2 sm:$0xff]
        %s2785 = scalar_lea.vmem [#allocation2], 96
        %v2786 = vld [vmem:[%s2785] ss:$2 sm:$0xff]
        %s2787 = scalar_lea.vmem [#allocation2], 112
        %v2788 = vld [vmem:[%s2787] ss:$2 sm:$0xff]
        %s2789 = scalar_lea.vmem [#allocation2], 1
        %v2790 = vld [vmem:[%s2789] ss:$2 sm:$0xff]
        %s2791 = scalar_lea.vmem [#allocation2], 17
        %v2792 = vld [vmem:[%s2791] ss:$2 sm:$0xff]
        %s2793 = scalar_lea.vmem [#allocation2], 33
        %v2794 = vld [vmem:[%s2793] ss:$2 sm:$0xff]
        %s2795 = scalar_lea.vmem [#allocation2], 49
        %v2796 = vld [vmem:[%s2795] ss:$2 sm:$0xff]
        %s2797 = scalar_lea.vmem [#allocation2], 65
        %v2798 = vld [vmem:[%s2797] ss:$2 sm:$0xff]
        %s2799 = scalar_lea.vmem [#allocation2], 81
        %v2800 = vld [vmem:[%s2799] ss:$2 sm:$0xff]
        %s2801 = scalar_lea.vmem [#allocation2], 97
        %v2802 = vld [vmem:[%s2801] ss:$2 sm:$0xff]
        %s2803 = scalar_lea.vmem [#allocation2], 113
        %v2804 = vld [vmem:[%s2803] ss:$2 sm:$0xff]
        %v2805 = vmax.f32 %v2774, %v2790
        %v2806 = vmax.f32 %v2776, %v2792
        %v2807 = vmax.f32 %v2778, %v2794
        %v2808 = vmax.f32 %v2780, %v2796
        %v2809 = vmax.f32 %v2782, %v2798
        %v2810 = vmax.f32 %v2784, %v2800
        %v2811 = vmax.f32 %v2786, %v2802
        %v2812 = vmax.f32 %v2788, %v2804
        %2813 = vst.msk [vmem:[%s190] sm:$0xff] %vm2757, %v2805
        %2814 = vst.msk [vmem:[%s190 + $0x8] sm:$0xff] %vm2757, %v2806
        %2815 = vst.msk [vmem:[%s190 + $0x10] sm:$0xff] %vm2757, %v2807
        %2816 = vst.msk [vmem:[%s190 + $0x18] sm:$0xff] %vm2757, %v2808
        %2817 = vst.msk [vmem:[%s190 + $0x20] sm:$0xff] %vm2757, %v2809
        %2818 = vst.msk [vmem:[%s190 + $0x28] sm:$0xff] %vm2757, %v2810
        %2819 = vst.msk [vmem:[%s190 + $0x30] sm:$0xff] %vm2757, %v2811
        %2820 = vst.msk [vmem:[%s190 + $0x38] sm:$0xff] %vm2757, %v2812
        %s2821 = sand.u32 %s115, 1
        %s2822 = scalar_lea.sflag [#allocation4], %s2821
        %s2823 = sand.u32 %s115, 1
        %s2824 = smul.addr %s2823, 64
        %s2825 = scalar_lea.vmem [#allocation3], %s2824
        // Predicated region
        $region37: #{tpu_custom_call.1} parent=35 // pred_check
          %p2826 = pneg %p125
        $region38: #{tpu_custom_call.1} parent=35 // pred_check_branch
          %2828 = sbr.rel (%p2826) target = $region40
        $region39: #{tpu_custom_call.1} parent=35 // pred_region
          %2830 = vsyncadd %s2822, 0
          %s2831 = smul.addr %s18, 8
          %s2832 = smul.addr %s2831, 8
          %s2833 = scalar_lea.hbm %s4, %s2832
          %s2834 = sshll.u32 %s2825, 4
          %s2835 = int_to_ptr.vmem [resolvable:$true] %s2834
          %s2836 = sshll.u32 %s2833, 4
          %s2837 = int_to_ptr.hbm [resolvable:$true] %s2836
          %2842 = dma.vmem_to_hbm [thread:$0]  %s2835, 1024, %s2837, %s2822, 128, 128, 8
        $region40: #{tpu_custom_call.1} parent=35 // pred_fallthru
          _
      $region36: #{tpu_custom_call.1} parent=5 // pred_fallthru
        _
      %p2843 = scmp.le.s32.totalorder 2, %s13
      // Predicated region
      $region41: #{tpu_custom_call.1} parent=5 // pred_check
        %p2844 = pneg %p2843
      $region42: #{tpu_custom_call.1} parent=5 // pred_check_branch
        %2846 = sbr.rel (%p2844) target = $region44
      $region43: #{tpu_custom_call.1} parent=5 // pred_region
        %s2847 = ssub.s32 %s13, 2
        // Predicated region
        $region45: #{tpu_custom_call.1} parent=43 // pred_check
          %p2848 = pneg %p131
        $region46: #{tpu_custom_call.1} parent=43 // pred_check_branch
          %2850 = sbr.rel (%p2848) target = $region48
        $region47: #{tpu_custom_call.1} parent=43 // pred_region
          %s2851 = sand.u32 %s116, 1
          %s2852 = scalar_lea.sflag [#allocation4], %s2851
          %s2853 = sand.u32 %s116, 1
          %s2854 = smul.addr %s2853, 64
          %s2855 = scalar_lea.vmem [#allocation3], %s2854
          %2857 = dma.done %s2852, 1024
        $region48: #{tpu_custom_call.1} parent=43 // pred_fallthru
          _
      $region44: #{tpu_custom_call.1} parent=5 // pred_fallthru
        _
    $region6: #{tpu_custom_call.1} parent=1 // loop_footer
      %s17 = sadd.s32 1, %s13
    $region7: #{tpu_custom_call.1} parent=1 // loop_footer_branch
      %12 = sbr.rel target = $region3
    $region8: #{tpu_custom_call.1} parent=1 // loop_exit
      _
    %2858 = vsyncpa [#allocation4], 1
    %s2859 = scalar_lea.sflag [#allocation4], 1
    %2860 = vsyncpa %s2859, 1

</llo_original>
